<compile_context>
chip_gen: v7x
topology: tpu7x:2x2x1
jax: 0.10.0
libtpu: 0.0.40
codegen_flags: <defaults>
</compile_context>

<pallas_src>
import jax
import jax.numpy as jnp
from jax.experimental import pallas as pl
from jax.experimental.pallas import tpu as pltpu

LABEL_SMOOTHING = 0.1  # matches nn.CrossEntropyLoss(label_smoothing=0.1)

# SMEM scratch accumulator slots (running sums across the batch grid).
_ACC_GLOBAL, _ACC_REGIONAL, _ACC_CONSIST, _ACC_ALIGN, _ACC_MULTI = range(5)
_NUM_ACC = 8
_OUT_SLOTS = 6  # global, regional, consistency, alignment, multimodal, total


def _make_kernel(*, num_regions, has_consistency, has_alignment, has_multimodal,
                 batch, tile_rows, num_classes, feat_dim, attn_rows_total):
    needs_mask = (batch % tile_rows) != 0
    half_rows = tile_rows // 2

    def kernel(w_ref, labels_ref, global_ref, *rest):
        regional_refs = rest[:num_regions]
        idx = num_regions
        final_ref = attn_ref = None
        if has_consistency:
            final_ref = rest[idx]; idx += 1
        if has_multimodal:
            attn_ref = rest[idx]; idx += 1
        out_ref, acc_ref = rest[idx], rest[idx + 1]

        step = pl.program_id(0)

        @pl.when(step == 0)
        def _init():
            for k in range(_NUM_ACC):
                acc_ref[k] = jnp.float32(0.0)

        if needs_mask:
            rows = (jax.lax.broadcasted_iota(jnp.int32, (tile_rows, 1), 0)
                    + step * tile_rows)
            row_valid = rows < batch
            rmask = row_valid.astype(jnp.float32)
        else:
            row_valid = rmask = None

        def keep_valid(x):
            # Zero the padded rows of a partial last block BEFORE exp/log so
            # stale-VMEM garbage can never turn into NaN/Inf in a masked row.
            return x if row_valid is None else jnp.where(row_valid, x, 0.0)

        def block_sum(per_row):            # (tm, 1) -> masked scalar sum
            if rmask is not None:
                per_row = per_row * rmask
            return jnp.sum(per_row)

        def row_sum(x):
            return jnp.sum(x, axis=-1, keepdims=True)

        labels = labels_ref[...]                                   # (tm, 1) i32
        col = jax.lax.broadcasted_iota(jnp.int32, (tile_rows, num_classes), 1)
        label_mask = col == labels                                 # (tm, C)
        # TODO(synk): out-of-range labels silently yield picked=0 here, where
        # torch.nn.CrossEntropyLoss would raise.

        inv_c = 1.0 / num_classes

        def ce_rows(shifted, log_z):
            # Smoothed CE straight from shifted logits (no logp materialised):
            #   logp[label] = s[label] - logZ ; mean_c logp = mean_c s - logZ
            picked = row_sum(jnp.where(label_mask, shifted, 0.0)) - log_z
            mean_lp = inv_c * row_sum(shifted) - log_z
            return -(1.0 - LABEL_SMOOTHING) * picked - LABEL_SMOOTHING * mean_lp

        # TODO(synk): when C is a large multiple of 128 and VALU/XLU is the
        # binding slot, move these row reductions to the (idle) MXU via
        # (tm,C)@(C,1) dots against ones / one-hot columns.

        # ---- global classification head ----
        xg = keep_valid(global_ref[...].astype(jnp.float32))
        sg = xg - jnp.max(xg, axis=-1, keepdims=True)
        log_zg = jnp.log(row_sum(jnp.exp(sg)))
        acc_ref[_ACC_GLOBAL] = acc_ref[_ACC_GLOBAL] + block_sum(ce_rows(sg, log_zg))

        # ---- regional head 0: CE + softmax reused by the alignment term ----
        x0 = keep_valid(regional_refs[0][...].astype(jnp.float32))
        s0 = x0 - jnp.max(x0, axis=-1, keepdims=True)
        e0 = jnp.exp(s0)
        z0 = row_sum(e0)
        log_z0 = jnp.log(z0)
        reg_sum = block_sum(ce_rows(s0, log_z0))
        if has_alignment:
            p0 = e0 * (1.0 / z0)                   # no second exp: reuse exp(s0)
            p0_logp0 = row_sum(p0 * s0) - log_z0   # per-row sum_c p0*logp0
            align_sum = jnp.float32(0.0)

        # ---- remaining regional heads: CE + KL fused (small live set) ----
        for r_ref in regional_refs[1:]:
            xr = keep_valid(r_ref[...].astype(jnp.float32))
            sr = xr - jnp.max(xr, axis=-1, keepdims=True)
            log_zr = jnp.log(row_sum(jnp.exp(sr)))
            reg_sum = reg_sum + block_sum(ce_rows(sr, log_zr))
            if has_alignment:
                # sum_c p0*logq_r = sum_c p0*sr - logZ_r   (since sum_c p0 == 1)
                kl_rows = p0_logp0 - (row_sum(p0 * sr) - log_zr)
                align_sum = align_sum + block_sum(kl_rows)
        acc_ref[_ACC_REGIONAL] = acc_ref[_ACC_REGIONAL] + reg_sum
        if has_alignment:
            acc_ref[_ACC_ALIGN] = acc_ref[_ACC_ALIGN] + align_sum

        # ---- consistency: MSE between the two batch halves ----
        if has_consistency:
            f = final_ref[...].astype(jnp.float32)        # (2, tm//2, D)
            d = f[0] - f[1]
            if needs_mask:
                hrows = (jax.lax.broadcasted_iota(jnp.int32, (half_rows, 1), 0)
                         + step * half_rows)
                d = jnp.where(hrows < (batch // 2), d, 0.0)
            acc_ref[_ACC_CONSIST] = acc_ref[_ACC_CONSIST] + jnp.sum(d * d)

        # ---- multimodal: negative mean attention entropy ----
        if has_multimodal:
            w = attn_ref[...].astype(jnp.float32)         # (tm, H*L)
            if row_valid is not None:
                w = jnp.where(row_valid, w, 0.0)          # 0*log(0+eps) == 0
            acc_ref[_ACC_MULTI] = acc_ref[_ACC_MULTI] + jnp.sum(w * jnp.log(w + 1e-8))

        # ---- finalize on the last grid step ----
        @pl.when(step == pl.num_programs(0) - 1)
        def _finalize():
            inv_b = 1.0 / batch
            g = acc_ref[_ACC_GLOBAL] * inv_b
            r = acc_ref[_ACC_REGIONAL] * (inv_b / num_regions)
            total = w_ref[0] * g + w_ref[1] * r
            out_ref[0] = g
            out_ref[1] = r
            if has_consistency:
                c = acc_ref[_ACC_CONSIST] * (1.0 / ((batch // 2) * feat_dim))
                out_ref[2] = c
                total = total + w_ref[2] * c
            else:
                out_ref[2] = jnp.float32(0.0)
            if has_alignment:
                a = acc_ref[_ACC_ALIGN] * (inv_b / (num_regions - 1))
                out_ref[3] = a
                total = total + w_ref[3] * a
            else:
                out_ref[3] = jnp.float32(0.0)
            if has_multimodal:
                m = acc_ref[_ACC_MULTI] * (1.0 / attn_rows_total)
                out_ref[4] = m
                total = total + w_ref[4] * m
            else:
                out_ref[4] = jnp.float32(0.0)
            out_ref[5] = total

    return kernel


def _pick_block_rows(batch, per_row_bytes, budget_bytes):
    """Largest multiple-of-16 row tile whose per-step residency fits the budget."""
    if batch <= 16 or batch * per_row_bytes <= budget_bytes:
        return batch                      # whole batch fits in a single step
    tm = min(budget_bytes // max(per_row_bytes, 1), 1024)
    tm = max(16, (tm // 16) * 16)
    return int(min(tm, batch))


def fsra_mat_loss(outputs, labels, loss_weights, num_classes, *,
                  block_rows=None, vmem_budget_bytes=40 * 1024 * 1024):
    """Pallas implementation of FSRAMATLoss.forward.

    vmem_budget_bytes sizes the batch row tile.  The default (40 MiB) is
    v7x-safe (64 MiB physical VMEM); on v5e/v6e (128 MiB VMEM) pass ~96 MiB to
    reach larger, HBM-roofline-friendly tiles (>= 512 rows).
    """
    del num_classes  # class count comes from the logits' last dim
    global_pred = outputs['global_prediction']
    regional = list(outputs['regional_predictions'])
    num_regions = len(regional)
    assert num_regions >= 1, "FSRA-MAT loss needs at least one regional head"

    has_consistency = 'aligned_features' in outputs
    has_alignment = num_regions > 1
    attn = outputs.get('attention_weights', None)
    has_multimodal = attn is not None

    b, n_cls = global_pred.shape
    in_itemsize = jnp.dtype(global_pred.dtype).itemsize

    # Per-row per-step bytes: double-buffered inputs + live f32 intermediates.
    per_row = 2 * ((num_regions + 1) * n_cls * in_itemsize + 4)
    per_row += 4 * n_cls * 4
    feat_dim = 1
    if has_consistency:
        ff = outputs['final_features']
        feat_dim = int(ff.shape[-1])
        per_row += 2 * feat_dim * jnp.dtype(ff.dtype).itemsize + feat_dim * 4
    attn_cols = 0
    attn_rows_total = 1
    if has_multimodal:
        assert attn.shape[0] == b, "attention_weights must be batch-major"
        attn_cols = int(attn.size) // b
        attn_rows_total = int(attn.size) // int(attn.shape[-1])
        per_row += 2 * attn_cols * jnp.dtype(attn.dtype).itemsize + attn_cols * 4

    tm = block_rows if block_rows is not None else _pick_block_rows(
        b, per_row, vmem_budget_bytes)
    assert tm == b or (tm % 16 == 0 and 0 < tm < b), \
        "block_rows must be the full batch or a multiple of 16"
    if has_consistency:
        assert b % 2 == 0, "consistency loss needs an even batch (as in PyTorch)"

    grid_steps = int(pl.cdiv(b, tm))

    labels2d = labels.astype(jnp.int32).reshape(b, 1)
    w_keys = ('global_loss', 'regional_loss', 'consistency_loss',
              'alignment_loss', 'multimodal_loss')
    w_arr = jnp.stack([jnp.asarray(loss_weights.get(k, 0.0), dtype=jnp.float32)
                       for k in w_keys])

    smem = pl.BlockSpec(memory_space=pltpu.MemorySpace.SMEM)

    def row_block(cols):
        return pl.BlockSpec((tm, cols), lambda i: (i, 0))

    args = [w_arr, labels2d, global_pred] + regional
    in_specs = [smem, row_block(1), row_block(n_cls)] + [row_block(n_cls)] * num_regions
    # TODO(synk): if production n_cls stays well below 128, pack the R+1 heads
    # along the lane axis ((B, (R+1)*C) + segmented row reductions) to stop
    # wasting vreg lanes; irrelevant once C >= 128.

    if has_consistency:
        ff = outputs['final_features']
        ff3 = ff.reshape(2, b // 2, feat_dim)     # pairs row j with row j + B/2
        args.append(ff3)
        in_specs.append(pl.BlockSpec((2, tm // 2, feat_dim), lambda i: (0, i, 0)))

    if has_multimodal:
        attn2d = attn.reshape(b, attn_cols)       # free reshape, no pad copy
        args.append(attn2d)
        in_specs.append(row_block(attn_cols))

    kernel = _make_kernel(
        num_regions=num_regions, has_consistency=has_consistency,
        has_alignment=has_alignment, has_multimodal=has_multimodal,
        batch=b, tile_rows=tm, num_classes=n_cls, feat_dim=feat_dim,
        attn_rows_total=attn_rows_total)

    bytes_accessed = sum(int(a.size) * a.dtype.itemsize for a in args) + _OUT_SLOTS * 4
    flops = 12 * (num_regions + 1) * b * n_cls + 3 * b * attn_cols
    transcendentals = (num_regions + 2) * b * n_cls + b * attn_cols

    vmem_limit = int(min(100 * 1024 * 1024, max(32 * 1024 * 1024, 2 * tm * per_row)))

    out = pl.pallas_call(
        kernel,
        out_shape=jax.ShapeDtypeStruct((_OUT_SLOTS,), jnp.float32),
        grid_spec=pltpu.PrefetchScalarGridSpec(
            num_scalar_prefetch=0,
            grid=(grid_steps,),
            in_specs=in_specs,
            out_specs=smem,
            scratch_shapes=[pltpu.SMEM((_NUM_ACC,), jnp.float32)]),
        compiler_params=pltpu.CompilerParams(
            # The grid axis carries the running-sum accumulators (reduction
            # over batch) so it must be "arbitrary".  TODO(synk): per-block
            # partial-sum outputs would allow "parallel" for v7x's 2 TCs.
            dimension_semantics=("arbitrary",),
            vmem_limit_bytes=vmem_limit),
        cost_estimate=pl.CostEstimate(flops=flops,
                                      transcendentals=transcendentals,
                                      bytes_accessed=bytes_accessed),
    )(*args)

    losses = {'global_loss': out[0], 'regional_loss': out[1]}
    if has_consistency:
        losses['consistency_loss'] = out[2]
    if has_alignment:
        losses['alignment_loss'] = out[3]
    if has_multimodal:
        losses['multimodal_loss'] = out[4]
    losses['total'] = out[5]
    return losses


def _reference_loss(outputs, labels, loss_weights, num_classes):
    """Pure-JAX reference mirroring the PyTorch forward exactly."""
    onehot = jax.nn.one_hot(labels, num_classes, dtype=jnp.float32)

    def ce(logits):
        logp = jax.nn.log_softmax(logits.astype(jnp.float32), axis=-1)
        q = (1.0 - LABEL_SMOOTHING) * onehot + LABEL_SMOOTHING / num_classes
        return jnp.mean(-jnp.sum(q * logp, axis=-1))

    losses = {}
    gl = ce(outputs['global_prediction'])
    losses['global_loss'] = gl
    preds = outputs['regional_predictions']
    rl = sum(ce(p) for p in preds) / len(preds)
    losses['regional_loss'] = rl
    total = loss_weights['global_loss'] * gl + loss_weights['regional_loss'] * rl
    if 'aligned_features' in outputs:
        ff = outputs['final_features']
        half = labels.shape[0] // 2
        cl = jnp.mean((ff[:half] - ff[half:]) ** 2)
        losses['consistency_loss'] = cl
        total = total + loss_weights['consistency_loss'] * cl
    if len(preds) > 1:
        p0 = jax.nn.softmax(preds[0], axis=1)
        al = 0.0
        for p in preds[1:]:
            logq = jax.nn.log_softmax(p, axis=1)
            al = al + jnp.sum(p0 * (jnp.log(p0) - logq)) / labels.shape[0]
        al = al / (len(preds) - 1)
        losses['alignment_loss'] = al
        total = total + loss_weights['alignment_loss'] * al
    if outputs.get('attention_weights') is not None:
        w = outputs['attention_weights']
        ent = -jnp.sum(w * jnp.log(w + 1e-8), axis=-1)
        ml = -jnp.mean(ent)
        losses['multimodal_loss'] = ml
        total = total + loss_weights['multimodal_loss'] * ml
    losses['total'] = total
    return losses


if __name__ == "__main__":
    # Small shapes, but B=40 with block_rows=16 deliberately exercises the new
    # batch grid (3 steps), accumulator init/finalize and the masked partial
    # last block (8 of 16 rows valid).
    B, C, R, D, H, L = 40, 16, 3, 32, 4, 8
    loss_weights = {'global_loss': 1.0, 'regional_loss': 0.5,
                    'consistency_loss': 0.3, 'alignment_loss': 0.2,
                    'multimodal_loss': 0.1}

    key = jax.random.PRNGKey(0)
    kg, kr, kf, ka, kl = jax.random.split(key, 5)
    outputs = {
        'global_prediction': jax.random.normal(kg, (B, C), jnp.float32),
        'regional_predictions': [jax.random.normal(jax.random.fold_in(kr, i),
                                                   (B, C), jnp.float32)
                                 for i in range(R)],
        'aligned_features': True,  # presence flag, as in the PyTorch module
        'final_features': jax.random.normal(kf, (B, D), jnp.float32),
        'attention_weights': jax.nn.softmax(
            jax.random.normal(ka, (B, H, L), jnp.float32), axis=-1),
    }
    labels = jax.random.randint(kl, (B,), 0, C, dtype=jnp.int32)

    losses = fsra_mat_loss(outputs, labels, loss_weights, C, block_rows=16)
    losses = jax.block_until_ready(losses)

    ref = _reference_loss(outputs, labels, loss_weights, C)
    for k in ref:
        assert jnp.allclose(losses[k], ref[k], rtol=1e-4, atol=1e-4), (
            k, losses[k], ref[k])

    print("KERNEL_OK")
</pallas_src>

<mosaic_0001>
module attributes {stable_mosaic.version = 11 : i64} {
  func.func @kernel(%arg0: i32, %arg1: memref<5xf32, #tpu.memory_space<smem>>, %arg2: memref<16x1xi32, #tpu.memory_space<vmem>>, %arg3: memref<16x16xf32, #tpu.memory_space<vmem>>, %arg4: memref<16x16xf32, #tpu.memory_space<vmem>>, %arg5: memref<16x16xf32, #tpu.memory_space<vmem>>, %arg6: memref<16x16xf32, #tpu.memory_space<vmem>>, %arg7: memref<2x8x32xf32, #tpu.memory_space<vmem>>, %arg8: memref<16x32xf32, #tpu.memory_space<vmem>>, %arg9: memref<6xf32, #tpu.memory_space<smem>>, %arg10: memref<8xf32, #tpu.memory_space<smem>>) attributes {dimension_semantics = [#tpu.dimension_semantics<arbitrary>], iteration_bounds = array<i64: 3>, scalar_prefetch = 0 : i64, scratch_operands = 1 : i64, tpu.core_type = #tpu.core_type<tc>, window_params = [{transform_indices = @transform_0, window_bounds = array<i64: 5>}, {transform_indices = @transform_1, window_bounds = array<i64: 16, 1>}, {transform_indices = @transform_2, window_bounds = array<i64: 16, 16>}, {transform_indices = @transform_3, window_bounds = array<i64: 16, 16>}, {transform_indices = @transform_4, window_bounds = array<i64: 16, 16>}, {transform_indices = @transform_5, window_bounds = array<i64: 16, 16>}, {transform_indices = @transform_6, window_bounds = array<i64: 2, 8, 32>}, {transform_indices = @transform_7, window_bounds = array<i64: 16, 32>}, {transform_indices = @transform_8, window_bounds = array<i64: 6>}]} {
    %c0_i32 = arith.constant 0 : i32
    %0 = arith.cmpi eq, %arg0, %c0_i32 : i32
    %1 = arith.extui %0 : i1 to i32
    %c0_i32_0 = arith.constant 0 : i32
    %2 = arith.cmpi ne, %1, %c0_i32_0 : i32
    scf.if %2 {
      %cst_73 = arith.constant 0.000000e+00 : f32
      %c0_74 = arith.constant 0 : index
      %231 = memref.load %arg10[%c0_74] : memref<8xf32, #tpu.memory_space<smem>>
      memref.store %cst_73, %arg10[%c0_74] : memref<8xf32, #tpu.memory_space<smem>>
      %cst_75 = arith.constant 0.000000e+00 : f32
      %c1_76 = arith.constant 1 : index
      %232 = memref.load %arg10[%c1_76] : memref<8xf32, #tpu.memory_space<smem>>
      memref.store %cst_75, %arg10[%c1_76] : memref<8xf32, #tpu.memory_space<smem>>
      %cst_77 = arith.constant 0.000000e+00 : f32
      %c2_78 = arith.constant 2 : index
      %233 = memref.load %arg10[%c2_78] : memref<8xf32, #tpu.memory_space<smem>>
      memref.store %cst_77, %arg10[%c2_78] : memref<8xf32, #tpu.memory_space<smem>>
      %cst_79 = arith.constant 0.000000e+00 : f32
      %c3_80 = arith.constant 3 : index
      %234 = memref.load %arg10[%c3_80] : memref<8xf32, #tpu.memory_space<smem>>
      memref.store %cst_79, %arg10[%c3_80] : memref<8xf32, #tpu.memory_space<smem>>
      %cst_81 = arith.constant 0.000000e+00 : f32
      %c4_82 = arith.constant 4 : index
      %235 = memref.load %arg10[%c4_82] : memref<8xf32, #tpu.memory_space<smem>>
      memref.store %cst_81, %arg10[%c4_82] : memref<8xf32, #tpu.memory_space<smem>>
      %cst_83 = arith.constant 0.000000e+00 : f32
      %c5 = arith.constant 5 : index
      %236 = memref.load %arg10[%c5] : memref<8xf32, #tpu.memory_space<smem>>
      memref.store %cst_83, %arg10[%c5] : memref<8xf32, #tpu.memory_space<smem>>
      %cst_84 = arith.constant 0.000000e+00 : f32
      %c6 = arith.constant 6 : index
      %237 = memref.load %arg10[%c6] : memref<8xf32, #tpu.memory_space<smem>>
      memref.store %cst_84, %arg10[%c6] : memref<8xf32, #tpu.memory_space<smem>>
      %cst_85 = arith.constant 0.000000e+00 : f32
      %c7 = arith.constant 7 : index
      %238 = memref.load %arg10[%c7] : memref<8xf32, #tpu.memory_space<smem>>
      memref.store %cst_85, %arg10[%c7] : memref<8xf32, #tpu.memory_space<smem>>
    } else {
    }
    %3 = tpu.iota {dimensions = array<i32: 0>} : vector<16x1xi32>
    %c16_i32 = arith.constant 16 : i32
    %4 = arith.muli %arg0, %c16_i32 : i32
    %5 = vector.broadcast %4 : i32 to vector<16x1xi32>
    %6 = arith.addi %3, %5 : vector<16x1xi32>
    %c40_i32 = arith.constant 40 : i32
    %7 = vector.broadcast %c40_i32 : i32 to vector<16x1xi32>
    %8 = arith.cmpi slt, %6, %7 : vector<16x1xi32>
    %9 = arith.extui %8 : vector<16x1xi1> to vector<16x1xi32>
    %10 = arith.sitofp %9 : vector<16x1xi32> to vector<16x1xf32>
    %c0 = arith.constant 0 : index
    %c0_1 = arith.constant 0 : index
    %11 = vector.load %arg2[%c0, %c0_1] : memref<16x1xi32, #tpu.memory_space<vmem>>, vector<16x1xi32>
    %12 = tpu.iota {dimensions = array<i32: 1>} : vector<16x16xi32>
    %13 = vector.broadcast %11 : vector<16x1xi32> to vector<16x16xi32>
    %14 = arith.cmpi eq, %12, %13 : vector<16x16xi32>
    %c0_2 = arith.constant 0 : index
    %c0_3 = arith.constant 0 : index
    %15 = vector.load %arg3[%c0_2, %c0_3] : memref<16x16xf32, #tpu.memory_space<vmem>>, vector<16x16xf32>
    %cst = arith.constant 0.000000e+00 : f32
    %16 = vector.shape_cast %8 : vector<16x1xi1> to vector<16x1xi1>
    %17 = vector.broadcast %16 : vector<16x1xi1> to vector<16x16xi1>
    %18 = vector.broadcast %cst : f32 to vector<16x16xf32>
    %19 = arith.select %17, %15, %18 : vector<16x16xi1>, vector<16x16xf32>
    %cst_4 = arith.constant dense<0xFF800000> : vector<16xf32>
    %20 = vector.multi_reduction <maximumf>, %19, %cst_4 [1] : vector<16x16xf32> to vector<16xf32>
    %21 = vector.shape_cast %20 : vector<16xf32> to vector<16x1xf32>
    %22 = vector.broadcast %21 : vector<16x1xf32> to vector<16x16xf32>
    %23 = arith.subf %19, %22 : vector<16x16xf32>
    %24 = math.exp %23 : vector<16x16xf32>
    %cst_5 = arith.constant dense<0.000000e+00> : vector<16xf32>
    %25 = vector.multi_reduction <add>, %24, %cst_5 [1] : vector<16x16xf32> to vector<16xf32>
    %26 = vector.shape_cast %25 : vector<16xf32> to vector<16x1xf32>
    %27 = math.log %26 : vector<16x1xf32>
    %c0_6 = arith.constant 0 : index
    %28 = memref.load %arg10[%c0_6] : memref<8xf32, #tpu.memory_space<smem>>
    %cst_7 = arith.constant 0.000000e+00 : f32
    %29 = vector.broadcast %cst_7 : f32 to vector<16x16xf32>
    %30 = arith.select %14, %23, %29 : vector<16x16xi1>, vector<16x16xf32>
    %cst_8 = arith.constant dense<0.000000e+00> : vector<16xf32>
    %31 = vector.multi_reduction <add>, %30, %cst_8 [1] : vector<16x16xf32> to vector<16xf32>
    %32 = vector.shape_cast %31 : vector<16xf32> to vector<16x1xf32>
    %33 = arith.subf %32, %27 : vector<16x1xf32>
    %cst_9 = arith.constant dense<0.000000e+00> : vector<16xf32>
    %34 = vector.multi_reduction <add>, %23, %cst_9 [1] : vector<16x16xf32> to vector<16xf32>
    %35 = vector.shape_cast %34 : vector<16xf32> to vector<16x1xf32>
    %cst_10 = arith.constant 6.250000e-02 : f32
    %36 = vector.broadcast %cst_10 : f32 to vector<16x1xf32>
    %37 = arith.mulf %36, %35 : vector<16x1xf32>
    %38 = arith.subf %37, %27 : vector<16x1xf32>
    %cst_11 = arith.constant -0.899999976 : f32
    %39 = vector.broadcast %cst_11 : f32 to vector<16x1xf32>
    %40 = arith.mulf %39, %33 : vector<16x1xf32>
    %cst_12 = arith.constant 1.000000e-01 : f32
    %41 = vector.broadcast %cst_12 : f32 to vector<16x1xf32>
    %42 = arith.mulf %41, %38 : vector<16x1xf32>
    %43 = arith.subf %40, %42 : vector<16x1xf32>
    %44 = arith.mulf %43, %10 : vector<16x1xf32>
    %45 = vector.shape_cast %44 : vector<16x1xf32> to vector<1x16x1xf32>
    %cst_13 = arith.constant dense<0.000000e+00> : vector<1xf32>
    %46 = vector.multi_reduction <add>, %45, %cst_13 [1, 2] : vector<1x16x1xf32> to vector<1xf32>
    %47 = vector.shape_cast %46 : vector<1xf32> to vector<1x1x1xf32>
    %48 = vector.extract %47[0, 0, 0] : f32 from vector<1x1x1xf32>
    %49 = arith.addf %28, %48 : f32
    %c0_14 = arith.constant 0 : index
    %50 = memref.load %arg10[%c0_14] : memref<8xf32, #tpu.memory_space<smem>>
    memref.store %49, %arg10[%c0_14] : memref<8xf32, #tpu.memory_space<smem>>
    %c0_15 = arith.constant 0 : index
    %c0_16 = arith.constant 0 : index
    %51 = vector.load %arg4[%c0_15, %c0_16] : memref<16x16xf32, #tpu.memory_space<vmem>>, vector<16x16xf32>
    %cst_17 = arith.constant 0.000000e+00 : f32
    %52 = vector.shape_cast %8 : vector<16x1xi1> to vector<16x1xi1>
    %53 = vector.broadcast %52 : vector<16x1xi1> to vector<16x16xi1>
    %54 = vector.broadcast %cst_17 : f32 to vector<16x16xf32>
    %55 = arith.select %53, %51, %54 : vector<16x16xi1>, vector<16x16xf32>
    %cst_18 = arith.constant dense<0xFF800000> : vector<16xf32>
    %56 = vector.multi_reduction <maximumf>, %55, %cst_18 [1] : vector<16x16xf32> to vector<16xf32>
    %57 = vector.shape_cast %56 : vector<16xf32> to vector<16x1xf32>
    %58 = vector.broadcast %57 : vector<16x1xf32> to vector<16x16xf32>
    %59 = arith.subf %55, %58 : vector<16x16xf32>
    %60 = math.exp %59 : vector<16x16xf32>
    %cst_19 = arith.constant dense<0.000000e+00> : vector<16xf32>
    %61 = vector.multi_reduction <add>, %60, %cst_19 [1] : vector<16x16xf32> to vector<16xf32>
    %62 = vector.shape_cast %61 : vector<16xf32> to vector<16x1xf32>
    %63 = math.log %62 : vector<16x1xf32>
    %cst_20 = arith.constant 0.000000e+00 : f32
    %64 = vector.broadcast %cst_20 : f32 to vector<16x16xf32>
    %65 = arith.select %14, %59, %64 : vector<16x16xi1>, vector<16x16xf32>
    %cst_21 = arith.constant dense<0.000000e+00> : vector<16xf32>
    %66 = vector.multi_reduction <add>, %65, %cst_21 [1] : vector<16x16xf32> to vector<16xf32>
    %67 = vector.shape_cast %66 : vector<16xf32> to vector<16x1xf32>
    %68 = arith.subf %67, %63 : vector<16x1xf32>
    %cst_22 = arith.constant dense<0.000000e+00> : vector<16xf32>
    %69 = vector.multi_reduction <add>, %59, %cst_22 [1] : vector<16x16xf32> to vector<16xf32>
    %70 = vector.shape_cast %69 : vector<16xf32> to vector<16x1xf32>
    %cst_23 = arith.constant 6.250000e-02 : f32
    %71 = vector.broadcast %cst_23 : f32 to vector<16x1xf32>
    %72 = arith.mulf %71, %70 : vector<16x1xf32>
    %73 = arith.subf %72, %63 : vector<16x1xf32>
    %cst_24 = arith.constant -0.899999976 : f32
    %74 = vector.broadcast %cst_24 : f32 to vector<16x1xf32>
    %75 = arith.mulf %74, %68 : vector<16x1xf32>
    %cst_25 = arith.constant 1.000000e-01 : f32
    %76 = vector.broadcast %cst_25 : f32 to vector<16x1xf32>
    %77 = arith.mulf %76, %73 : vector<16x1xf32>
    %78 = arith.subf %75, %77 : vector<16x1xf32>
    %79 = arith.mulf %78, %10 : vector<16x1xf32>
    %80 = vector.shape_cast %79 : vector<16x1xf32> to vector<1x16x1xf32>
    %cst_26 = arith.constant dense<0.000000e+00> : vector<1xf32>
    %81 = vector.multi_reduction <add>, %80, %cst_26 [1, 2] : vector<1x16x1xf32> to vector<1xf32>
    %82 = vector.shape_cast %81 : vector<1xf32> to vector<1x1x1xf32>
    %83 = vector.extract %82[0, 0, 0] : f32 from vector<1x1x1xf32>
    %cst_27 = arith.constant 1.000000e+00 : f32
    %84 = vector.broadcast %cst_27 : f32 to vector<16x1xf32>
    %85 = arith.divf %84, %62 : vector<16x1xf32>
    %86 = vector.broadcast %85 : vector<16x1xf32> to vector<16x16xf32>
    %87 = arith.mulf %60, %86 : vector<16x16xf32>
    %88 = arith.mulf %87, %59 : vector<16x16xf32>
    %cst_28 = arith.constant dense<0.000000e+00> : vector<16xf32>
    %89 = vector.multi_reduction <add>, %88, %cst_28 [1] : vector<16x16xf32> to vector<16xf32>
    %90 = vector.shape_cast %89 : vector<16xf32> to vector<16x1xf32>
    %91 = arith.subf %90, %63 : vector<16x1xf32>
    %c0_29 = arith.constant 0 : index
    %c0_30 = arith.constant 0 : index
    %92 = vector.load %arg5[%c0_29, %c0_30] : memref<16x16xf32, #tpu.memory_space<vmem>>, vector<16x16xf32>
    %cst_31 = arith.constant 0.000000e+00 : f32
    %93 = vector.shape_cast %8 : vector<16x1xi1> to vector<16x1xi1>
    %94 = vector.broadcast %93 : vector<16x1xi1> to vector<16x16xi1>
    %95 = vector.broadcast %cst_31 : f32 to vector<16x16xf32>
    %96 = arith.select %94, %92, %95 : vector<16x16xi1>, vector<16x16xf32>
    %cst_32 = arith.constant dense<0xFF800000> : vector<16xf32>
    %97 = vector.multi_reduction <maximumf>, %96, %cst_32 [1] : vector<16x16xf32> to vector<16xf32>
    %98 = vector.shape_cast %97 : vector<16xf32> to vector<16x1xf32>
    %99 = vector.broadcast %98 : vector<16x1xf32> to vector<16x16xf32>
    %100 = arith.subf %96, %99 : vector<16x16xf32>
    %101 = math.exp %100 : vector<16x16xf32>
    %cst_33 = arith.constant dense<0.000000e+00> : vector<16xf32>
    %102 = vector.multi_reduction <add>, %101, %cst_33 [1] : vector<16x16xf32> to vector<16xf32>
    %103 = vector.shape_cast %102 : vector<16xf32> to vector<16x1xf32>
    %104 = math.log %103 : vector<16x1xf32>
    %cst_34 = arith.constant 0.000000e+00 : f32
    %105 = vector.broadcast %cst_34 : f32 to vector<16x16xf32>
    %106 = arith.select %14, %100, %105 : vector<16x16xi1>, vector<16x16xf32>
    %cst_35 = arith.constant dense<0.000000e+00> : vector<16xf32>
    %107 = vector.multi_reduction <add>, %106, %cst_35 [1] : vector<16x16xf32> to vector<16xf32>
    %108 = vector.shape_cast %107 : vector<16xf32> to vector<16x1xf32>
    %109 = arith.subf %108, %104 : vector<16x1xf32>
    %cst_36 = arith.constant dense<0.000000e+00> : vector<16xf32>
    %110 = vector.multi_reduction <add>, %100, %cst_36 [1] : vector<16x16xf32> to vector<16xf32>
    %111 = vector.shape_cast %110 : vector<16xf32> to vector<16x1xf32>
    %cst_37 = arith.constant 6.250000e-02 : f32
    %112 = vector.broadcast %cst_37 : f32 to vector<16x1xf32>
    %113 = arith.mulf %112, %111 : vector<16x1xf32>
    %114 = arith.subf %113, %104 : vector<16x1xf32>
    %cst_38 = arith.constant -0.899999976 : f32
    %115 = vector.broadcast %cst_38 : f32 to vector<16x1xf32>
    %116 = arith.mulf %115, %109 : vector<16x1xf32>
    %cst_39 = arith.constant 1.000000e-01 : f32
    %117 = vector.broadcast %cst_39 : f32 to vector<16x1xf32>
    %118 = arith.mulf %117, %114 : vector<16x1xf32>
    %119 = arith.subf %116, %118 : vector<16x1xf32>
    %120 = arith.mulf %119, %10 : vector<16x1xf32>
    %121 = vector.shape_cast %120 : vector<16x1xf32> to vector<1x16x1xf32>
    %cst_40 = arith.constant dense<0.000000e+00> : vector<1xf32>
    %122 = vector.multi_reduction <add>, %121, %cst_40 [1, 2] : vector<1x16x1xf32> to vector<1xf32>
    %123 = vector.shape_cast %122 : vector<1xf32> to vector<1x1x1xf32>
    %124 = vector.extract %123[0, 0, 0] : f32 from vector<1x1x1xf32>
    %125 = arith.addf %83, %124 : f32
    %126 = arith.mulf %87, %100 : vector<16x16xf32>
    %cst_41 = arith.constant dense<0.000000e+00> : vector<16xf32>
    %127 = vector.multi_reduction <add>, %126, %cst_41 [1] : vector<16x16xf32> to vector<16xf32>
    %128 = vector.shape_cast %127 : vector<16xf32> to vector<16x1xf32>
    %129 = arith.subf %128, %104 : vector<16x1xf32>
    %130 = arith.subf %91, %129 : vector<16x1xf32>
    %131 = arith.mulf %130, %10 : vector<16x1xf32>
    %132 = vector.shape_cast %131 : vector<16x1xf32> to vector<1x16x1xf32>
    %cst_42 = arith.constant dense<0.000000e+00> : vector<1xf32>
    %133 = vector.multi_reduction <add>, %132, %cst_42 [1, 2] : vector<1x16x1xf32> to vector<1xf32>
    %134 = vector.shape_cast %133 : vector<1xf32> to vector<1x1x1xf32>
    %135 = vector.extract %134[0, 0, 0] : f32 from vector<1x1x1xf32>
    %cst_43 = arith.constant 0.000000e+00 : f32
    %136 = arith.addf %cst_43, %135 : f32
    %c0_44 = arith.constant 0 : index
    %c0_45 = arith.constant 0 : index
    %137 = vector.load %arg6[%c0_44, %c0_45] : memref<16x16xf32, #tpu.memory_space<vmem>>, vector<16x16xf32>
    %cst_46 = arith.constant 0.000000e+00 : f32
    %138 = vector.shape_cast %8 : vector<16x1xi1> to vector<16x1xi1>
    %139 = vector.broadcast %138 : vector<16x1xi1> to vector<16x16xi1>
    %140 = vector.broadcast %cst_46 : f32 to vector<16x16xf32>
    %141 = arith.select %139, %137, %140 : vector<16x16xi1>, vector<16x16xf32>
    %cst_47 = arith.constant dense<0xFF800000> : vector<16xf32>
    %142 = vector.multi_reduction <maximumf>, %141, %cst_47 [1] : vector<16x16xf32> to vector<16xf32>
    %143 = vector.shape_cast %142 : vector<16xf32> to vector<16x1xf32>
    %144 = vector.broadcast %143 : vector<16x1xf32> to vector<16x16xf32>
    %145 = arith.subf %141, %144 : vector<16x16xf32>
    %146 = math.exp %145 : vector<16x16xf32>
    %cst_48 = arith.constant dense<0.000000e+00> : vector<16xf32>
    %147 = vector.multi_reduction <add>, %146, %cst_48 [1] : vector<16x16xf32> to vector<16xf32>
    %148 = vector.shape_cast %147 : vector<16xf32> to vector<16x1xf32>
    %149 = math.log %148 : vector<16x1xf32>
    %cst_49 = arith.constant 0.000000e+00 : f32
    %150 = vector.broadcast %cst_49 : f32 to vector<16x16xf32>
    %151 = arith.select %14, %145, %150 : vector<16x16xi1>, vector<16x16xf32>
    %cst_50 = arith.constant dense<0.000000e+00> : vector<16xf32>
    %152 = vector.multi_reduction <add>, %151, %cst_50 [1] : vector<16x16xf32> to vector<16xf32>
    %153 = vector.shape_cast %152 : vector<16xf32> to vector<16x1xf32>
    %154 = arith.subf %153, %149 : vector<16x1xf32>
    %cst_51 = arith.constant dense<0.000000e+00> : vector<16xf32>
    %155 = vector.multi_reduction <add>, %145, %cst_51 [1] : vector<16x16xf32> to vector<16xf32>
    %156 = vector.shape_cast %155 : vector<16xf32> to vector<16x1xf32>
    %cst_52 = arith.constant 6.250000e-02 : f32
    %157 = vector.broadcast %cst_52 : f32 to vector<16x1xf32>
    %158 = arith.mulf %157, %156 : vector<16x1xf32>
    %159 = arith.subf %158, %149 : vector<16x1xf32>
    %cst_53 = arith.constant -0.899999976 : f32
    %160 = vector.broadcast %cst_53 : f32 to vector<16x1xf32>
    %161 = arith.mulf %160, %154 : vector<16x1xf32>
    %cst_54 = arith.constant 1.000000e-01 : f32
    %162 = vector.broadcast %cst_54 : f32 to vector<16x1xf32>
    %163 = arith.mulf %162, %159 : vector<16x1xf32>
    %164 = arith.subf %161, %163 : vector<16x1xf32>
    %165 = arith.mulf %164, %10 : vector<16x1xf32>
    %166 = vector.shape_cast %165 : vector<16x1xf32> to vector<1x16x1xf32>
    %cst_55 = arith.constant dense<0.000000e+00> : vector<1xf32>
    %167 = vector.multi_reduction <add>, %166, %cst_55 [1, 2] : vector<1x16x1xf32> to vector<1xf32>
    %168 = vector.shape_cast %167 : vector<1xf32> to vector<1x1x1xf32>
    %169 = vector.extract %168[0, 0, 0] : f32 from vector<1x1x1xf32>
    %170 = arith.addf %125, %169 : f32
    %171 = arith.mulf %87, %145 : vector<16x16xf32>
    %cst_56 = arith.constant dense<0.000000e+00> : vector<16xf32>
    %172 = vector.multi_reduction <add>, %171, %cst_56 [1] : vector<16x16xf32> to vector<16xf32>
    %173 = vector.shape_cast %172 : vector<16xf32> to vector<16x1xf32>
    %174 = arith.subf %173, %149 : vector<16x1xf32>
    %175 = arith.subf %91, %174 : vector<16x1xf32>
    %176 = arith.mulf %175, %10 : vector<16x1xf32>
    %177 = vector.shape_cast %176 : vector<16x1xf32> to vector<1x16x1xf32>
    %cst_57 = arith.constant dense<0.000000e+00> : vector<1xf32>
    %178 = vector.multi_reduction <add>, %177, %cst_57 [1, 2] : vector<1x16x1xf32> to vector<1xf32>
    %179 = vector.shape_cast %178 : vector<1xf32> to vector<1x1x1xf32>
    %180 = vector.extract %179[0, 0, 0] : f32 from vector<1x1x1xf32>
    %181 = arith.addf %136, %180 : f32
    %c1 = arith.constant 1 : index
    %182 = memref.load %arg10[%c1] : memref<8xf32, #tpu.memory_space<smem>>
    %183 = arith.addf %182, %170 : f32
    %c1_58 = arith.constant 1 : index
    %184 = memref.load %arg10[%c1_58] : memref<8xf32, #tpu.memory_space<smem>>
    memref.store %183, %arg10[%c1_58] : memref<8xf32, #tpu.memory_space<smem>>
    %c3 = arith.constant 3 : index
    %185 = memref.load %arg10[%c3] : memref<8xf32, #tpu.memory_space<smem>>
    %186 = arith.addf %185, %181 : f32
    %c3_59 = arith.constant 3 : index
    %187 = memref.load %arg10[%c3_59] : memref<8xf32, #tpu.memory_space<smem>>
    memref.store %186, %arg10[%c3_59] : memref<8xf32, #tpu.memory_space<smem>>
    %c0_60 = arith.constant 0 : index
    %c0_61 = arith.constant 0 : index
    %c0_62 = arith.constant 0 : index
    %188 = vector.load %arg7[%c0_60, %c0_61, %c0_62] : memref<2x8x32xf32, #tpu.memory_space<vmem>>, vector<2x8x32xf32>
    %189 = vector.extract_strided_slice %188 {offsets = [0, 0, 0], sizes = [1, 8, 32], strides = [1, 1, 1]} : vector<2x8x32xf32> to vector<1x8x32xf32>
    %190 = vector.shape_cast %189 : vector<1x8x32xf32> to vector<8x32xf32>
    %191 = vector.extract_strided_slice %188 {offsets = [1, 0, 0], sizes = [1, 8, 32], strides = [1, 1, 1]} : vector<2x8x32xf32> to vector<1x8x32xf32>
    %192 = vector.shape_cast %191 : vector<1x8x32xf32> to vector<8x32xf32>
    %193 = arith.subf %190, %192 : vector<8x32xf32>
    %194 = tpu.iota {dimensions = array<i32: 0>} : vector<8x1xi32>
    %c8_i32 = arith.constant 8 : i32
    %195 = arith.muli %arg0, %c8_i32 : i32
    %196 = vector.broadcast %195 : i32 to vector<8x1xi32>
    %197 = arith.addi %194, %196 : vector<8x1xi32>
    %c20_i32 = arith.constant 20 : i32
    %198 = vector.broadcast %c20_i32 : i32 to vector<8x1xi32>
    %199 = arith.cmpi slt, %197, %198 : vector<8x1xi32>
    %cst_63 = arith.constant 0.000000e+00 : f32
    %200 = vector.shape_cast %199 : vector<8x1xi1> to vector<8x1xi1>
    %201 = vector.broadcast %200 : vector<8x1xi1> to vector<8x32xi1>
    %202 = vector.broadcast %cst_63 : f32 to vector<8x32xf32>
    %203 = arith.select %201, %193, %202 : vector<8x32xi1>, vector<8x32xf32>
    %c2 = arith.constant 2 : index
    %204 = memref.load %arg10[%c2] : memref<8xf32, #tpu.memory_space<smem>>
    %205 = arith.mulf %203, %203 : vector<8x32xf32>
    %206 = vector.shape_cast %205 : vector<8x32xf32> to vector<1x8x32xf32>
    %cst_64 = arith.constant dense<0.000000e+00> : vector<1xf32>
    %207 = vector.multi_reduction <add>, %206, %cst_64 [1, 2] : vector<1x8x32xf32> to vector<1xf32>
    %208 = vector.shape_cast %207 : vector<1xf32> to vector<1x1x1xf32>
    %209 = vector.extract %208[0, 0, 0] : f32 from vector<1x1x1xf32>
    %210 = arith.addf %204, %209 : f32
    %c2_65 = arith.constant 2 : index
    %211 = memref.load %arg10[%c2_65] : memref<8xf32, #tpu.memory_space<smem>>
    memref.store %210, %arg10[%c2_65] : memref<8xf32, #tpu.memory_space<smem>>
    %c0_66 = arith.constant 0 : index
    %c0_67 = arith.constant 0 : index
    %212 = vector.load %arg8[%c0_66, %c0_67] : memref<16x32xf32, #tpu.memory_space<vmem>>, vector<16x32xf32>
    %cst_68 = arith.constant 0.000000e+00 : f32
    %213 = vector.shape_cast %8 : vector<16x1xi1> to vector<16x1xi1>
    %214 = vector.broadcast %213 : vector<16x1xi1> to vector<16x32xi1>
    %215 = vector.broadcast %cst_68 : f32 to vector<16x32xf32>
    %216 = arith.select %214, %212, %215 : vector<16x32xi1>, vector<16x32xf32>
    %c4 = arith.constant 4 : index
    %217 = memref.load %arg10[%c4] : memref<8xf32, #tpu.memory_space<smem>>
    %cst_69 = arith.constant 9.99999993E-9 : f32
    %218 = vector.broadcast %cst_69 : f32 to vector<16x32xf32>
    %219 = arith.addf %216, %218 : vector<16x32xf32>
    %220 = math.log %219 : vector<16x32xf32>
    %221 = arith.mulf %216, %220 : vector<16x32xf32>
    %222 = vector.shape_cast %221 : vector<16x32xf32> to vector<1x16x32xf32>
    %cst_70 = arith.constant dense<0.000000e+00> : vector<1xf32>
    %223 = vector.multi_reduction <add>, %222, %cst_70 [1, 2] : vector<1x16x32xf32> to vector<1xf32>
    %224 = vector.shape_cast %223 : vector<1xf32> to vector<1x1x1xf32>
    %225 = vector.extract %224[0, 0, 0] : f32 from vector<1x1x1xf32>
    %226 = arith.addf %217, %225 : f32
    %c4_71 = arith.constant 4 : index
    %227 = memref.load %arg10[%c4_71] : memref<8xf32, #tpu.memory_space<smem>>
    memref.store %226, %arg10[%c4_71] : memref<8xf32, #tpu.memory_space<smem>>
    %c2_i32 = arith.constant 2 : i32
    %228 = arith.cmpi eq, %arg0, %c2_i32 : i32
    %229 = arith.extui %228 : i1 to i32
    %c0_i32_72 = arith.constant 0 : i32
    %230 = arith.cmpi ne, %229, %c0_i32_72 : i32
    scf.if %230 {
      %c0_73 = arith.constant 0 : index
      %231 = memref.load %arg10[%c0_73] : memref<8xf32, #tpu.memory_space<smem>>
      %cst_74 = arith.constant 2.500000e-02 : f32
      %232 = arith.mulf %231, %cst_74 : f32
      %c1_75 = arith.constant 1 : index
      %233 = memref.load %arg10[%c1_75] : memref<8xf32, #tpu.memory_space<smem>>
      %cst_76 = arith.constant 0.00833333377 : f32
      %234 = arith.mulf %233, %cst_76 : f32
      %c0_77 = arith.constant 0 : index
      %235 = memref.load %arg1[%c0_77] : memref<5xf32, #tpu.memory_space<smem>>
      %236 = arith.mulf %235, %232 : f32
      %c1_78 = arith.constant 1 : index
      %237 = memref.load %arg1[%c1_78] : memref<5xf32, #tpu.memory_space<smem>>
      %238 = arith.mulf %237, %234 : f32
      %239 = arith.addf %236, %238 : f32
      %c0_79 = arith.constant 0 : index
      %240 = memref.load %arg9[%c0_79] : memref<6xf32, #tpu.memory_space<smem>>
      memref.store %232, %arg9[%c0_79] : memref<6xf32, #tpu.memory_space<smem>>
      %c1_80 = arith.constant 1 : index
      %241 = memref.load %arg9[%c1_80] : memref<6xf32, #tpu.memory_space<smem>>
      memref.store %234, %arg9[%c1_80] : memref<6xf32, #tpu.memory_space<smem>>
      %c2_81 = arith.constant 2 : index
      %242 = memref.load %arg10[%c2_81] : memref<8xf32, #tpu.memory_space<smem>>
      %cst_82 = arith.constant 1.562500e-03 : f32
      %243 = arith.mulf %242, %cst_82 : f32
      %c2_83 = arith.constant 2 : index
      %244 = memref.load %arg9[%c2_83] : memref<6xf32, #tpu.memory_space<smem>>
      memref.store %243, %arg9[%c2_83] : memref<6xf32, #tpu.memory_space<smem>>
      %c2_84 = arith.constant 2 : index
      %245 = memref.load %arg1[%c2_84] : memref<5xf32, #tpu.memory_space<smem>>
      %246 = arith.mulf %245, %243 : f32
      %247 = arith.addf %239, %246 : f32
      %c3_85 = arith.constant 3 : index
      %248 = memref.load %arg10[%c3_85] : memref<8xf32, #tpu.memory_space<smem>>
      %cst_86 = arith.constant 1.250000e-02 : f32
      %249 = arith.mulf %248, %cst_86 : f32
      %c3_87 = arith.constant 3 : index
      %250 = memref.load %arg9[%c3_87] : memref<6xf32, #tpu.memory_space<smem>>
      memref.store %249, %arg9[%c3_87] : memref<6xf32, #tpu.memory_space<smem>>
      %c3_88 = arith.constant 3 : index
      %251 = memref.load %arg1[%c3_88] : memref<5xf32, #tpu.memory_space<smem>>
      %252 = arith.mulf %251, %249 : f32
      %253 = arith.addf %247, %252 : f32
      %c4_89 = arith.constant 4 : index
      %254 = memref.load %arg10[%c4_89] : memref<8xf32, #tpu.memory_space<smem>>
      %cst_90 = arith.constant 6.250000e-03 : f32
      %255 = arith.mulf %254, %cst_90 : f32
      %c4_91 = arith.constant 4 : index
      %256 = memref.load %arg9[%c4_91] : memref<6xf32, #tpu.memory_space<smem>>
      memref.store %255, %arg9[%c4_91] : memref<6xf32, #tpu.memory_space<smem>>
      %c4_92 = arith.constant 4 : index
      %257 = memref.load %arg1[%c4_92] : memref<5xf32, #tpu.memory_space<smem>>
      %258 = arith.mulf %257, %255 : f32
      %259 = arith.addf %253, %258 : f32
      %c5 = arith.constant 5 : index
      %260 = memref.load %arg9[%c5] : memref<6xf32, #tpu.memory_space<smem>>
      memref.store %259, %arg9[%c5] : memref<6xf32, #tpu.memory_space<smem>>
    } else {
    }
    return
  }
  func.func @transform_0(%arg0: i32) -> i32 {
    %c0_i32 = arith.constant 0 : i32
    %c0_i32_0 = arith.constant 0 : i32
    return %c0_i32 : i32
  }
  func.func @transform_1(%arg0: i32) -> (i32, i32) {
    %c0_i32 = arith.constant 0 : i32
    %c0_i32_0 = arith.constant 0 : i32
    return %arg0, %c0_i32 : i32, i32
  }
  func.func @transform_2(%arg0: i32) -> (i32, i32) {
    %c0_i32 = arith.constant 0 : i32
    %c0_i32_0 = arith.constant 0 : i32
    return %arg0, %c0_i32 : i32, i32
  }
  func.func @transform_3(%arg0: i32) -> (i32, i32) {
    %c0_i32 = arith.constant 0 : i32
    %c0_i32_0 = arith.constant 0 : i32
    return %arg0, %c0_i32 : i32, i32
  }
  func.func @transform_4(%arg0: i32) -> (i32, i32) {
    %c0_i32 = arith.constant 0 : i32
    %c0_i32_0 = arith.constant 0 : i32
    return %arg0, %c0_i32 : i32, i32
  }
  func.func @transform_5(%arg0: i32) -> (i32, i32) {
    %c0_i32 = arith.constant 0 : i32
    %c0_i32_0 = arith.constant 0 : i32
    return %arg0, %c0_i32 : i32, i32
  }
  func.func @transform_6(%arg0: i32) -> (i32, i32, i32) {
    %c0_i32 = arith.constant 0 : i32
    %c0_i32_0 = arith.constant 0 : i32
    %c0_i32_1 = arith.constant 0 : i32
    return %c0_i32, %arg0, %c0_i32_0 : i32, i32, i32
  }
  func.func @transform_7(%arg0: i32) -> (i32, i32) {
    %c0_i32 = arith.constant 0 : i32
    %c0_i32_0 = arith.constant 0 : i32
    return %arg0, %c0_i32 : i32, i32
  }
  func.func @transform_8(%arg0: i32) -> i32 {
    %c0_i32 = arith.constant 0 : i32
    %c0_i32_0 = arith.constant 0 : i32
    return %c0_i32 : i32
  }
}

</mosaic_0001>

<llo_original>
// kernel: tpu_custom_call.1
$region0: #{tpu_custom_call.1}
  #allocation0 [shape = 'u32[]', space=smem, size = 0x4, offset = 0x4, fixed_abs, tag = 'smem constant byte address 0x4 - core index']
  #allocation1 [shape = 'u32[144,128]{1,0:T(1,128)}', space=vmem, size = 0x12000, scoped, tag = 'internal scratch']
  #allocation2 [shape = 'f32[8]{0:T(128)}', space=smem, size = 0x200, scoped, tag = 'scratch operand']
  %s0 = inlined_call_operand.vmem [shape: f32[5], index: 0, kind: input, shape index: {}]
  %s1 = inlined_call_operand.vmem [shape: s32[40,1], index: 1, kind: input, shape index: {}]
  %s2 = inlined_call_operand.vmem [shape: f32[40,16], index: 2, kind: input, shape index: {}]
  %s3 = inlined_call_operand.vmem [shape: f32[40,16], index: 3, kind: input, shape index: {}]
  %s4 = inlined_call_operand.vmem [shape: f32[40,16], index: 4, kind: input, shape index: {}]
  %s5 = inlined_call_operand.vmem [shape: f32[40,16], index: 5, kind: input, shape index: {}]
  %s6 = inlined_call_operand.vmem [shape: f32[2,20,32], index: 6, kind: input, shape index: {}]
  %s7 = inlined_call_operand.vmem [shape: f32[40,32], index: 7, kind: input, shape index: {}]
  %s8 = inlined_call_operand.hbm [shape: f32[6], index: 8, kind: output, shape index: {}]
  %s9 = sld [smem:[#allocation0]]
  $region115: #{tpu_custom_call.1} parent=0
    _
  %s11 = ssub.s32 1, %s9
  %s12 = scalar_select 0, %s11, %s9
  $region1: #{tpu_custom_call.1} parent=0
    #allocation3 [shape = 'u8[512]{0}', space=smem, size = 0x200, scoped, tag = 'input window, operand 0, single buffered']
    #allocation4 [shape = 's32[2]{0}', space=sflag, size = 0x8, scoped, tag = 'scoped memory for tpu_custom_call.1']
    #allocation5 [shape = 's32[2]{0}', space=sflag, size = 0x8, scoped, tag = 'scoped memory for tpu_custom_call.1']
    #allocation6 [shape = 'u8[16384]{0}', space=vmem, size = 0x4000, scoped, tag = 'input window, operand 6']
    #allocation7 [shape = 'u8[512]{0}', space=smem, size = 0x200, scoped, tag = 'output window, operand 0, single buffered']
    %13 = vsyncpa [#allocation5], 0
    %14 = vsyncpa [#allocation4], 0
    loop: start=0, step=1, limit=5
    $region2: #{tpu_custom_call.1} parent=1 // loop_pre_header
      _
    $region3: #{tpu_custom_call.1} parent=1 // loop_header
      %s16 = sphi 0, %s20
      %p17 = scmp.ge.s32.totalorder %s16, 5
      %s24 = sphi 0, %s24
      %s26 = sphi 0, %s24
      %s27 = sphi 0, %s26
      %s41 = sphi 0, %s27
      %s47 = sphi 0, %s49
      %s50 = sphi 0, %s47
      %s51 = sphi 0, %s50
      %s67 = sphi 0, %s51
      %s73 = sphi 0, %s75
      %s76 = sphi 0, %s73
      %s77 = sphi 0, %s76
      %s93 = sphi 0, %s77
      %s99 = sphi 0, %s101
      %s102 = sphi 0, %s99
      %s103 = sphi 0, %s102
      %s119 = sphi 0, %s103
      %s125 = sphi 0, %s127
      %s128 = sphi 0, %s125
      %s129 = sphi 0, %s128
      %s145 = sphi 0, %s129
      %s151 = sphi 0, %s153
      %s154 = sphi 0, %s151
      %s155 = sphi 0, %s154
      %s171 = sphi 0, %s155
      %s177 = sphi 0, %s179
      %s180 = sphi 0, %s177
      %s181 = sphi 0, %s180
      %s197 = sphi 0, %s181
      %s203 = sphi 0, %s205
      %s206 = sphi 0, %s203
      %s207 = sphi 0, %s206
      %s223 = sphi 0, %s207
      %s227 = sphi 0, %s227
      %s229 = sphi 0, %s227
      %s230 = sphi 0, %s229
      %s244 = sphi 0, %s230
    $region4: #{tpu_custom_call.1} parent=1 // loop_header_branch
      %19 = sbr.rel (%p17) target = $region8
    $region5: #{tpu_custom_call.1} parent=1 // loop_body
      %s21 = ssub.s32 %s16, 1
      %s22 = ssub.s32 %s16, 2
      %s23 = sadd.s32 %s16, 1
      %s25 = sadd.s32 %s24, 1
      %p28 = scmp.eq.s32.totalorder %s16, 2
      %p29 = scmp.ne.s32.totalorder %s24, %s26
      %p30 = scmp.eq.s32.totalorder %s16, 0
      %p31 = por %p29, %p30
      %p32 = scmp.ne.s32.totalorder %s24, %s26
      %p33 = scmp.eq.s32.totalorder %s21, 2
      %p34 = por %p32, %p33
      %p35 = scmp.ne.s32.totalorder %s26, %s27
      %p36 = scmp.eq.s32.totalorder %s21, 0
      %p37 = por %p35, %p36
      %p38 = scmp.ne.s32.totalorder %s26, %s27
      %p39 = scmp.eq.s32.totalorder %s22, 2
      %p40 = por %p38, %p39
      %p42 = scmp.ne.s32.totalorder %s27, %s41
      %p43 = scmp.eq.s32.totalorder %s22, 0
      %p44 = por %p42, %p43
      %s45 = ssub.s32 %s16, %s23
      %p46 = scmp.eq.s32.totalorder %s45, 0
      %s48 = sadd.s32 %s47, 1
      %s49 = scalar_select %p46, %s47, %s48
      %p52 = pneg %p46
      %p53 = scmp.eq.s32.totalorder %s16, 2
      %p54 = por %p52, %p53
      %p55 = scmp.ne.s32.totalorder %s47, %s50
      %p56 = scmp.eq.s32.totalorder %s16, 0
      %p57 = por %p55, %p56
      %p58 = scmp.ne.s32.totalorder %s47, %s50
      %p59 = scmp.eq.s32.totalorder %s21, 2
      %p60 = por %p58, %p59
      %p61 = scmp.ne.s32.totalorder %s50, %s51
      %p62 = scmp.eq.s32.totalorder %s21, 0
      %p63 = por %p61, %p62
      %p64 = scmp.ne.s32.totalorder %s50, %s51
      %p65 = scmp.eq.s32.totalorder %s22, 2
      %p66 = por %p64, %p65
      %p68 = scmp.ne.s32.totalorder %s51, %s67
      %p69 = scmp.eq.s32.totalorder %s22, 0
      %p70 = por %p68, %p69
      %s71 = ssub.s32 %s16, %s23
      %p72 = scmp.eq.s32.totalorder %s71, 0
      %s74 = sadd.s32 %s73, 1
      %s75 = scalar_select %p72, %s73, %s74
      %p78 = pneg %p72
      %p79 = scmp.eq.s32.totalorder %s16, 2
      %p80 = por %p78, %p79
      %p81 = scmp.ne.s32.totalorder %s73, %s76
      %p82 = scmp.eq.s32.totalorder %s16, 0
      %p83 = por %p81, %p82
      %p84 = scmp.ne.s32.totalorder %s73, %s76
      %p85 = scmp.eq.s32.totalorder %s21, 2
      %p86 = por %p84, %p85
      %p87 = scmp.ne.s32.totalorder %s76, %s77
      %p88 = scmp.eq.s32.totalorder %s21, 0
      %p89 = por %p87, %p88
      %p90 = scmp.ne.s32.totalorder %s76, %s77
      %p91 = scmp.eq.s32.totalorder %s22, 2
      %p92 = por %p90, %p91
      %p94 = scmp.ne.s32.totalorder %s77, %s93
      %p95 = scmp.eq.s32.totalorder %s22, 0
      %p96 = por %p94, %p95
      %s97 = ssub.s32 %s16, %s23
      %p98 = scmp.eq.s32.totalorder %s97, 0
      %s100 = sadd.s32 %s99, 1
      %s101 = scalar_select %p98, %s99, %s100
      %p104 = pneg %p98
      %p105 = scmp.eq.s32.totalorder %s16, 2
      %p106 = por %p104, %p105
      %p107 = scmp.ne.s32.totalorder %s99, %s102
      %p108 = scmp.eq.s32.totalorder %s16, 0
      %p109 = por %p107, %p108
      %p110 = scmp.ne.s32.totalorder %s99, %s102
      %p111 = scmp.eq.s32.totalorder %s21, 2
      %p112 = por %p110, %p111
      %p113 = scmp.ne.s32.totalorder %s102, %s103
      %p114 = scmp.eq.s32.totalorder %s21, 0
      %p115 = por %p113, %p114
      %p116 = scmp.ne.s32.totalorder %s102, %s103
      %p117 = scmp.eq.s32.totalorder %s22, 2
      %p118 = por %p116, %p117
      %p120 = scmp.ne.s32.totalorder %s103, %s119
      %p121 = scmp.eq.s32.totalorder %s22, 0
      %p122 = por %p120, %p121
      %s123 = ssub.s32 %s16, %s23
      %p124 = scmp.eq.s32.totalorder %s123, 0
      %s126 = sadd.s32 %s125, 1
      %s127 = scalar_select %p124, %s125, %s126
      %p130 = pneg %p124
      %p131 = scmp.eq.s32.totalorder %s16, 2
      %p132 = por %p130, %p131
      %p133 = scmp.ne.s32.totalorder %s125, %s128
      %p134 = scmp.eq.s32.totalorder %s16, 0
      %p135 = por %p133, %p134
      %p136 = scmp.ne.s32.totalorder %s125, %s128
      %p137 = scmp.eq.s32.totalorder %s21, 2
      %p138 = por %p136, %p137
      %p139 = scmp.ne.s32.totalorder %s128, %s129
      %p140 = scmp.eq.s32.totalorder %s21, 0
      %p141 = por %p139, %p140
      %p142 = scmp.ne.s32.totalorder %s128, %s129
      %p143 = scmp.eq.s32.totalorder %s22, 2
      %p144 = por %p142, %p143
      %p146 = scmp.ne.s32.totalorder %s129, %s145
      %p147 = scmp.eq.s32.totalorder %s22, 0
      %p148 = por %p146, %p147
      %s149 = ssub.s32 %s16, %s23
      %p150 = scmp.eq.s32.totalorder %s149, 0
      %s152 = sadd.s32 %s151, 1
      %s153 = scalar_select %p150, %s151, %s152
      %p156 = pneg %p150
      %p157 = scmp.eq.s32.totalorder %s16, 2
      %p158 = por %p156, %p157
      %p159 = scmp.ne.s32.totalorder %s151, %s154
      %p160 = scmp.eq.s32.totalorder %s16, 0
      %p161 = por %p159, %p160
      %p162 = scmp.ne.s32.totalorder %s151, %s154
      %p163 = scmp.eq.s32.totalorder %s21, 2
      %p164 = por %p162, %p163
      %p165 = scmp.ne.s32.totalorder %s154, %s155
      %p166 = scmp.eq.s32.totalorder %s21, 0
      %p167 = por %p165, %p166
      %p168 = scmp.ne.s32.totalorder %s154, %s155
      %p169 = scmp.eq.s32.totalorder %s22, 2
      %p170 = por %p168, %p169
      %p172 = scmp.ne.s32.totalorder %s155, %s171
      %p173 = scmp.eq.s32.totalorder %s22, 0
      %p174 = por %p172, %p173
      %s175 = ssub.s32 %s16, %s23
      %p176 = scmp.eq.s32.totalorder %s175, 0
      %s178 = sadd.s32 %s177, 1
      %s179 = scalar_select %p176, %s177, %s178
      %p182 = pneg %p176
      %p183 = scmp.eq.s32.totalorder %s16, 2
      %p184 = por %p182, %p183
      %p185 = scmp.ne.s32.totalorder %s177, %s180
      %p186 = scmp.eq.s32.totalorder %s16, 0
      %p187 = por %p185, %p186
      %p188 = scmp.ne.s32.totalorder %s177, %s180
      %p189 = scmp.eq.s32.totalorder %s21, 2
      %p190 = por %p188, %p189
      %p191 = scmp.ne.s32.totalorder %s180, %s181
      %p192 = scmp.eq.s32.totalorder %s21, 0
      %p193 = por %p191, %p192
      %p194 = scmp.ne.s32.totalorder %s180, %s181
      %p195 = scmp.eq.s32.totalorder %s22, 2
      %p196 = por %p194, %p195
      %p198 = scmp.ne.s32.totalorder %s181, %s197
      %p199 = scmp.eq.s32.totalorder %s22, 0
      %p200 = por %p198, %p199
      %s201 = ssub.s32 %s16, %s23
      %p202 = scmp.eq.s32.totalorder %s201, 0
      %s204 = sadd.s32 %s203, 1
      %s205 = scalar_select %p202, %s203, %s204
      %p208 = pneg %p202
      %p209 = scmp.eq.s32.totalorder %s16, 2
      %p210 = por %p208, %p209
      %p211 = scmp.ne.s32.totalorder %s203, %s206
      %p212 = scmp.eq.s32.totalorder %s16, 0
      %p213 = por %p211, %p212
      %p214 = scmp.ne.s32.totalorder %s203, %s206
      %p215 = scmp.eq.s32.totalorder %s21, 2
      %p216 = por %p214, %p215
      %p217 = scmp.ne.s32.totalorder %s206, %s207
      %p218 = scmp.eq.s32.totalorder %s21, 0
      %p219 = por %p217, %p218
      %p220 = scmp.ne.s32.totalorder %s206, %s207
      %p221 = scmp.eq.s32.totalorder %s22, 2
      %p222 = por %p220, %p221
      %p224 = scmp.ne.s32.totalorder %s207, %s223
      %p225 = scmp.eq.s32.totalorder %s22, 0
      %p226 = por %p224, %p225
      %s228 = sadd.s32 %s227, 1
      %p231 = scmp.eq.s32.totalorder %s16, 2
      %p232 = scmp.ne.s32.totalorder %s227, %s229
      %p233 = scmp.eq.s32.totalorder %s16, 0
      %p234 = por %p232, %p233
      %p235 = scmp.ne.s32.totalorder %s227, %s229
      %p236 = scmp.eq.s32.totalorder %s21, 2
      %p237 = por %p235, %p236
      %p238 = scmp.ne.s32.totalorder %s229, %s230
      %p239 = scmp.eq.s32.totalorder %s21, 0
      %p240 = por %p238, %p239
      %p241 = scmp.ne.s32.totalorder %s229, %s230
      %p242 = scmp.eq.s32.totalorder %s22, 2
      %p243 = por %p241, %p242
      %p245 = scmp.ne.s32.totalorder %s230, %s244
      %p246 = scmp.eq.s32.totalorder %s22, 0
      %p247 = por %p245, %p246
      %p248 = scmp.le.s32.totalorder 1, %s16
      %p249 = scmp.lt.s32.totalorder %s16, 4
      %p250 = pnand %p248, %p249
      %p251 = pneg %p250
      // Predicated region
      $region9: #{tpu_custom_call.1} parent=5 // pred_check
        _
      $region10: #{tpu_custom_call.1} parent=5 // pred_check_branch
        %253 = sbr.rel (%p250) target = $region12
      $region11: #{tpu_custom_call.1} parent=5 // pred_region
        %s254 = ssub.s32 %s16, 1
        // Predicated region
        $region13: #{tpu_custom_call.1} parent=11 // pred_check
          %p255 = pneg %p37
        $region14: #{tpu_custom_call.1} parent=11 // pred_check_branch
          %257 = sbr.rel (%p255) target = $region16
        $region15: #{tpu_custom_call.1} parent=11 // pred_region
          %s259 = ssub.s32 16, 16
          %260 = vsyncadd [#allocation5], %s259
          %s262 = sshll.u32 %s0, 4
          %s263 = int_to_ptr.vmem [resolvable:$true] %s262
          %265 = dma.vmem_to_smem %s263, 16, [#allocation3], [#allocation5]
        $region16: #{tpu_custom_call.1} parent=11 // pred_fallthru
          _
      $region12: #{tpu_custom_call.1} parent=5 // pred_fallthru
        _
      %p266 = scmp.lt.s32.totalorder %s16, 3
      // Predicated region
      $region17: #{tpu_custom_call.1} parent=5 // pred_check
        %p267 = pneg %p266
      $region18: #{tpu_custom_call.1} parent=5 // pred_check_branch
        %269 = sbr.rel (%p267) target = $region20
      $region19: #{tpu_custom_call.1} parent=5 // pred_region
        // Predicated region
        $region21: #{tpu_custom_call.1} parent=19 // pred_check
          %p270 = pneg %p57
        $region22: #{tpu_custom_call.1} parent=19 // pred_check_branch
          %272 = sbr.rel (%p270) target = $region24
        $region23: #{tpu_custom_call.1} parent=19 // pred_region
          %s273 = smul.u32 2, %s16
          %s274 = ssub.s32 5, %s273
          %p275 = scmp.lt.s32.totalorder %s274, 2
          %s276 = scalar_select %p275, %s274, 2
          %s277 = smul.u32 128, %s276
          %p278 = scmp.lt.s32.totalorder %s273, 4
          %s279 = scalar_select %p278, %s273, 4
          %s280 = smul.addr %s279, 8
          %s281 = scalar_lea.vmem %s1, %s280
          %s282 = smul.u32 2, %s16
          %s283 = ssub.s32 5, %s282
          %p284 = scmp.lt.s32.totalorder %s283, 2
          %s285 = scalar_select %p284, %s283, 2
          %s286 = smul.u32 128, %s285
        $region24: #{tpu_custom_call.1} parent=19 // pred_fallthru
          _
        // Predicated region
        $region25: #{tpu_custom_call.1} parent=19 // pred_check
          %p287 = pneg %p83
        $region26: #{tpu_custom_call.1} parent=19 // pred_check_branch
          %289 = sbr.rel (%p287) target = $region28
        $region27: #{tpu_custom_call.1} parent=19 // pred_region
          %s290 = smul.u32 2, %s16
          %s291 = ssub.s32 5, %s290
          %p292 = scmp.lt.s32.totalorder %s291, 2
          %s293 = scalar_select %p292, %s291, 2
          %s294 = smul.u32 128, %s293
          %p295 = scmp.lt.s32.totalorder %s290, 4
          %s296 = scalar_select %p295, %s290, 4
          %s297 = smul.addr %s296, 8
          %s298 = scalar_lea.vmem %s2, %s297
          %s299 = smul.u32 2, %s16
          %s300 = ssub.s32 5, %s299
          %p301 = scmp.lt.s32.totalorder %s300, 2
          %s302 = scalar_select %p301, %s300, 2
          %s303 = smul.u32 128, %s302
        $region28: #{tpu_custom_call.1} parent=19 // pred_fallthru
          _
        // Predicated region
        $region29: #{tpu_custom_call.1} parent=19 // pred_check
          %p304 = pneg %p109
        $region30: #{tpu_custom_call.1} parent=19 // pred_check_branch
          %306 = sbr.rel (%p304) target = $region32
        $region31: #{tpu_custom_call.1} parent=19 // pred_region
          %s307 = smul.u32 2, %s16
          %s308 = ssub.s32 5, %s307
          %p309 = scmp.lt.s32.totalorder %s308, 2
          %s310 = scalar_select %p309, %s308, 2
          %s311 = smul.u32 128, %s310
          %p312 = scmp.lt.s32.totalorder %s307, 4
          %s313 = scalar_select %p312, %s307, 4
          %s314 = smul.addr %s313, 8
          %s315 = scalar_lea.vmem %s3, %s314
          %s316 = smul.u32 2, %s16
          %s317 = ssub.s32 5, %s316
          %p318 = scmp.lt.s32.totalorder %s317, 2
          %s319 = scalar_select %p318, %s317, 2
          %s320 = smul.u32 128, %s319
        $region32: #{tpu_custom_call.1} parent=19 // pred_fallthru
          _
        // Predicated region
        $region33: #{tpu_custom_call.1} parent=19 // pred_check
          %p321 = pneg %p135
        $region34: #{tpu_custom_call.1} parent=19 // pred_check_branch
          %323 = sbr.rel (%p321) target = $region36
        $region35: #{tpu_custom_call.1} parent=19 // pred_region
          %s324 = smul.u32 2, %s16
          %s325 = ssub.s32 5, %s324
          %p326 = scmp.lt.s32.totalorder %s325, 2
          %s327 = scalar_select %p326, %s325, 2
          %s328 = smul.u32 128, %s327
          %p329 = scmp.lt.s32.totalorder %s324, 4
          %s330 = scalar_select %p329, %s324, 4
          %s331 = smul.addr %s330, 8
          %s332 = scalar_lea.vmem %s4, %s331
          %s333 = smul.u32 2, %s16
          %s334 = ssub.s32 5, %s333
          %p335 = scmp.lt.s32.totalorder %s334, 2
          %s336 = scalar_select %p335, %s334, 2
          %s337 = smul.u32 128, %s336
        $region36: #{tpu_custom_call.1} parent=19 // pred_fallthru
          _
        // Predicated region
        $region37: #{tpu_custom_call.1} parent=19 // pred_check
          %p338 = pneg %p161
        $region38: #{tpu_custom_call.1} parent=19 // pred_check_branch
          %340 = sbr.rel (%p338) target = $region40
        $region39: #{tpu_custom_call.1} parent=19 // pred_region
          %s341 = smul.u32 2, %s16
          %s342 = ssub.s32 5, %s341
          %p343 = scmp.lt.s32.totalorder %s342, 2
          %s344 = scalar_select %p343, %s342, 2
          %s345 = smul.u32 128, %s344
          %p346 = scmp.lt.s32.totalorder %s341, 4
          %s347 = scalar_select %p346, %s341, 4
          %s348 = smul.addr %s347, 8
          %s349 = scalar_lea.vmem %s5, %s348
          %s350 = smul.u32 2, %s16
          %s351 = ssub.s32 5, %s350
          %p352 = scmp.lt.s32.totalorder %s351, 2
          %s353 = scalar_select %p352, %s351, 2
          %s354 = smul.u32 128, %s353
        $region40: #{tpu_custom_call.1} parent=19 // pred_fallthru
          _
        // Predicated region
        $region41: #{tpu_custom_call.1} parent=19 // pred_check
          %p355 = pneg %p187
        $region42: #{tpu_custom_call.1} parent=19 // pred_check_branch
          %357 = sbr.rel (%p355) target = $region44
        $region43: #{tpu_custom_call.1} parent=19 // pred_region
          %s358 = sand.u32 %s177, 1
          %s359 = sand.u32 %s177, 1
          %s360 = smul.addr %s359, 16
          %s361 = scalar_lea.vmem [#allocation6], %s360
          %s362 = smul.addr %s16, 8
          %s363 = scalar_lea.vmem %s6, %s362
          // Predicated region
          $region45: #{tpu_custom_call.1} parent=43 // pred_check
            _
          $region46: #{tpu_custom_call.1} parent=43 // pred_check_branch
            %365 = sbr.rel (0) target = $region48
          $region47: #{tpu_custom_call.1} parent=43 // pred_region
            // Predicated region
            $region49: #{tpu_custom_call.1} parent=47 // pred_check
              _
            $region50: #{tpu_custom_call.1} parent=47 // pred_check_branch
              %367 = sbr.rel (0) target = $region52
            $region51: #{tpu_custom_call.1} parent=47 // pred_region
              // Predicated region
              $region64: #{tpu_custom_call.1} parent=51 // pred_check
                _
              $region65: #{tpu_custom_call.1} parent=51 // pred_check_branch
                %384 = sbr.rel (0) target = $region67
              $region66: #{tpu_custom_call.1} parent=51 // pred_region
                loop: start=0, step=1, limit=1
                $region68: #{tpu_custom_call.1} parent=66 // loop_pre_header
                  _
                $region69: #{tpu_custom_call.1} parent=66 // loop_header
                  %s386 = sphi 0, %s390
                  %p387 = scmp.ge.s32.totalorder %s386, 1
                  %s391 = sphi %s363, %s363
                  %s392 = sphi %s361, %s361
                $region70: #{tpu_custom_call.1} parent=66 // loop_header_branch
                  %389 = sbr.rel (%p387) target = $region74
                $region71: #{tpu_custom_call.1} parent=66 // loop_body
                  %v393 = vld [vmem:[%s391] sm:$0xff]
                  %394 = vst [vmem:[%s392] sm:$0xff] %v393
                  %v395 = vld [vmem:[%s391 + $0x18] sm:$0xff]
                  %396 = vst [vmem:[%s392 + $0x8] sm:$0xff] %v395
                $region72: #{tpu_custom_call.1} parent=66 // loop_footer
                  %s390 = sadd.s32 1, %s386
                $region73: #{tpu_custom_call.1} parent=66 // loop_footer_branch
                  %385 = sbr.rel target = $region69
                $region74: #{tpu_custom_call.1} parent=66 // loop_exit
                  _
              $region67: #{tpu_custom_call.1} parent=51 // pred_fallthru
                _
              // Predicated region
              $region75: #{tpu_custom_call.1} parent=51 // pred_check
                _
              $region76: #{tpu_custom_call.1} parent=51 // pred_check_branch
                %398 = sbr.rel target = $region78
              $region77: #{tpu_custom_call.1} parent=51 // pred_region
                _
              $region78: #{tpu_custom_call.1} parent=51 // pred_fallthru
                _
            $region52: #{tpu_custom_call.1} parent=47 // pred_fallthru
              _
            // Predicated region
            $region53: #{tpu_custom_call.1} parent=47 // pred_check
              _
            $region54: #{tpu_custom_call.1} parent=47 // pred_check_branch
              %369 = sbr.rel target = $region56
            $region55: #{tpu_custom_call.1} parent=47 // pred_region
              loop: start=0, step=1, limit=1
              $region57: #{tpu_custom_call.1} parent=55 // loop_pre_header
                _
              $region58: #{tpu_custom_call.1} parent=55 // loop_header
                %s372 = sphi 0, %s376
                %p373 = scmp.ge.s32.totalorder %s372, 1
                %s377 = sphi %s363, %s363
                %s378 = sphi %s361, %s361
              $region59: #{tpu_custom_call.1} parent=55 // loop_header_branch
                %375 = sbr.rel (%p373) target = $region63
              $region60: #{tpu_custom_call.1} parent=55 // loop_body
                %v379 = vld [vmem:[%s377] sm:$0xff]
                %380 = vst [vmem:[%s378] sm:$0xff] %v379
                %v381 = vld [vmem:[%s377 + $0x18] sm:$0xff]
                %382 = vst [vmem:[%s378 + $0x8] sm:$0xff] %v381
              $region61: #{tpu_custom_call.1} parent=55 // loop_footer
                %s376 = sadd.s32 1, %s372
              $region62: #{tpu_custom_call.1} parent=55 // loop_footer_branch
                %371 = sbr.rel target = $region58
              $region63: #{tpu_custom_call.1} parent=55 // loop_exit
                _
            $region56: #{tpu_custom_call.1} parent=47 // pred_fallthru
              _
          $region48: #{tpu_custom_call.1} parent=43 // pred_fallthru
            _
          %399 = vnop
        $region44: #{tpu_custom_call.1} parent=19 // pred_fallthru
          _
        // Predicated region
        $region79: #{tpu_custom_call.1} parent=19 // pred_check
          %p400 = pneg %p213
        $region80: #{tpu_custom_call.1} parent=19 // pred_check_branch
          %402 = sbr.rel (%p400) target = $region82
        $region81: #{tpu_custom_call.1} parent=19 // pred_region
          %s403 = smul.u32 2, %s16
          %s404 = ssub.s32 5, %s403
          %p405 = scmp.lt.s32.totalorder %s404, 2
          %s406 = scalar_select %p405, %s404, 2
          %s407 = smul.u32 128, %s406
          %p408 = scmp.lt.s32.totalorder %s403, 4
          %s409 = scalar_select %p408, %s403, 4
          %s410 = smul.addr %s409, 8
          %s411 = scalar_lea.vmem %s7, %s410
          %s412 = smul.u32 2, %s16
          %s413 = ssub.s32 5, %s412
          %p414 = scmp.lt.s32.totalorder %s413, 2
          %s415 = scalar_select %p414, %s413, 2
          %s416 = smul.u32 128, %s415
        $region82: #{tpu_custom_call.1} parent=19 // pred_fallthru
          _
      $region20: #{tpu_custom_call.1} parent=5 // pred_fallthru
        _
      %p417 = scmp.le.s32.totalorder 1, %s16
      %p418 = scmp.lt.s32.totalorder %s16, 4
      %p419 = pnand %p417, %p418
      %p420 = pneg %p419
      // Predicated region
      $region83: #{tpu_custom_call.1} parent=5 // pred_check
        _
      $region84: #{tpu_custom_call.1} parent=5 // pred_check_branch
        %422 = sbr.rel (%p419) target = $region86
      $region85: #{tpu_custom_call.1} parent=5 // pred_region
        %s423 = ssub.s32 %s16, 1
        // Predicated region
        $region87: #{tpu_custom_call.1} parent=85 // pred_check
          %p424 = pneg %p37
        $region88: #{tpu_custom_call.1} parent=85 // pred_check_branch
          %426 = sbr.rel (%p424) target = $region90
        $region89: #{tpu_custom_call.1} parent=85 // pred_region
          %427 = dma.done [#allocation5], 16
        $region90: #{tpu_custom_call.1} parent=85 // pred_fallthru
          _
        %s428 = sand.u32 %s180, 1
        %s429 = sand.u32 %s180, 1
        %s430 = smul.addr %s429, 16
        %s431 = scalar_lea.vmem [#allocation6], %s430
        // Predicated region
        $region91: #{tpu_custom_call.1} parent=85 // pred_check
          %p432 = pneg %p193
        $region92: #{tpu_custom_call.1} parent=85 // pred_check_branch
          %434 = sbr.rel (%p432) target = $region94
        $region93: #{tpu_custom_call.1} parent=85 // pred_region
          _
        $region94: #{tpu_custom_call.1} parent=85 // pred_fallthru
          _
        %435 = sfence
        %p436 = pneg %p37
        %p437 = pneg %p34
        %s438 = smul.u32 2, %s21
        %s439 = ssub.s32 5, %s438
        %p440 = scmp.lt.s32.totalorder %s439, 2
        %s441 = scalar_select %p440, %s439, 2
        %s442 = smul.u32 128, %s441
        %p443 = scmp.lt.s32.totalorder %s438, 4
        %s444 = scalar_select %p443, %s438, 4
        %s445 = smul.addr %s444, 8
        %s446 = scalar_lea.vmem %s1, %s445
        %p447 = pneg %p63
        %p448 = pneg %p60
        %s449 = smul.u32 2, %s21
        %s450 = ssub.s32 5, %s449
        %p451 = scmp.lt.s32.totalorder %s450, 2
        %s452 = scalar_select %p451, %s450, 2
        %s453 = smul.u32 128, %s452
        %p454 = scmp.lt.s32.totalorder %s449, 4
        %s455 = scalar_select %p454, %s449, 4
        %s456 = smul.addr %s455, 8
        %s457 = scalar_lea.vmem %s2, %s456
        %p458 = pneg %p89
        %p459 = pneg %p86
        %s460 = smul.u32 2, %s21
        %s461 = ssub.s32 5, %s460
        %p462 = scmp.lt.s32.totalorder %s461, 2
        %s463 = scalar_select %p462, %s461, 2
        %s464 = smul.u32 128, %s463
        %p465 = scmp.lt.s32.totalorder %s460, 4
        %s466 = scalar_select %p465, %s460, 4
        %s467 = smul.addr %s466, 8
        %s468 = scalar_lea.vmem %s3, %s467
        %p469 = pneg %p115
        %p470 = pneg %p112
        %s471 = smul.u32 2, %s21
        %s472 = ssub.s32 5, %s471
        %p473 = scmp.lt.s32.totalorder %s472, 2
        %s474 = scalar_select %p473, %s472, 2
        %s475 = smul.u32 128, %s474
        %p476 = scmp.lt.s32.totalorder %s471, 4
        %s477 = scalar_select %p476, %s471, 4
        %s478 = smul.addr %s477, 8
        %s479 = scalar_lea.vmem %s4, %s478
        %p480 = pneg %p141
        %p481 = pneg %p138
        %s482 = smul.u32 2, %s21
        %s483 = ssub.s32 5, %s482
        %p484 = scmp.lt.s32.totalorder %s483, 2
        %s485 = scalar_select %p484, %s483, 2
        %s486 = smul.u32 128, %s485
        %p487 = scmp.lt.s32.totalorder %s482, 4
        %s488 = scalar_select %p487, %s482, 4
        %s489 = smul.addr %s488, 8
        %s490 = scalar_lea.vmem %s5, %s489
        %p491 = pneg %p167
        %p492 = pneg %p164
        %s493 = sand.u32 %s180, 1
        %s494 = sand.u32 %s180, 1
        %s495 = smul.addr %s494, 16
        %s496 = scalar_lea.vmem [#allocation6], %s495
        %p497 = pneg %p193
        %p498 = pneg %p190
        %s499 = smul.u32 2, %s21
        %s500 = ssub.s32 5, %s499
        %p501 = scmp.lt.s32.totalorder %s500, 2
        %s502 = scalar_select %p501, %s500, 2
        %s503 = smul.u32 128, %s502
        %p504 = scmp.lt.s32.totalorder %s499, 4
        %s505 = scalar_select %p504, %s499, 4
        %s506 = smul.addr %s505, 8
        %s507 = scalar_lea.vmem %s7, %s506
        %p508 = pneg %p219
        %p509 = pneg %p216
        %p510 = pneg %p240
        %p511 = pneg %p237
        %s512 = smul.u32 2, %s21
        %s513 = ssub.s32 5, %s512
        %p514 = scmp.lt.s32.totalorder %s513, 2
        %s515 = scalar_select %p514, %s513, 2
        %s516 = smul.u32 128, %s515
        %p517 = scmp.lt.s32.totalorder %s512, 4
        %s518 = scalar_select %p517, %s512, 4
        %s519 = smul.addr %s518, 8
        %s520 = scalar_lea.vmem %s1, %s519
        %s521 = smul.u32 2, %s21
        %s522 = ssub.s32 5, %s521
        %p523 = scmp.lt.s32.totalorder %s522, 2
        %s524 = scalar_select %p523, %s522, 2
        %s525 = smul.u32 128, %s524
        %s526 = smul.u32 2, %s21
        %s527 = ssub.s32 5, %s526
        %p528 = scmp.lt.s32.totalorder %s527, 2
        %s529 = scalar_select %p528, %s527, 2
        %s530 = smul.u32 128, %s529
        %p531 = scmp.lt.s32.totalorder %s526, 4
        %s532 = scalar_select %p531, %s526, 4
        %s533 = smul.addr %s532, 8
        %s534 = scalar_lea.vmem %s2, %s533
        %s535 = smul.u32 2, %s21
        %s536 = ssub.s32 5, %s535
        %p537 = scmp.lt.s32.totalorder %s536, 2
        %s538 = scalar_select %p537, %s536, 2
        %s539 = smul.u32 128, %s538
        %s540 = smul.u32 2, %s21
        %s541 = ssub.s32 5, %s540
        %p542 = scmp.lt.s32.totalorder %s541, 2
        %s543 = scalar_select %p542, %s541, 2
        %s544 = smul.u32 128, %s543
        %p545 = scmp.lt.s32.totalorder %s540, 4
        %s546 = scalar_select %p545, %s540, 4
        %s547 = smul.addr %s546, 8
        %s548 = scalar_lea.vmem %s3, %s547
        %s549 = smul.u32 2, %s21
        %s550 = ssub.s32 5, %s549
        %p551 = scmp.lt.s32.totalorder %s550, 2
        %s552 = scalar_select %p551, %s550, 2
        %s553 = smul.u32 128, %s552
        %s554 = smul.u32 2, %s21
        %s555 = ssub.s32 5, %s554
        %p556 = scmp.lt.s32.totalorder %s555, 2
        %s557 = scalar_select %p556, %s555, 2
        %s558 = smul.u32 128, %s557
        %p559 = scmp.lt.s32.totalorder %s554, 4
        %s560 = scalar_select %p559, %s554, 4
        %s561 = smul.addr %s560, 8
        %s562 = scalar_lea.vmem %s4, %s561
        %s563 = smul.u32 2, %s21
        %s564 = ssub.s32 5, %s563
        %p565 = scmp.lt.s32.totalorder %s564, 2
        %s566 = scalar_select %p565, %s564, 2
        %s567 = smul.u32 128, %s566
        %s568 = smul.u32 2, %s21
        %s569 = ssub.s32 5, %s568
        %p570 = scmp.lt.s32.totalorder %s569, 2
        %s571 = scalar_select %p570, %s569, 2
        %s572 = smul.u32 128, %s571
        %p573 = scmp.lt.s32.totalorder %s568, 4
        %s574 = scalar_select %p573, %s568, 4
        %s575 = smul.addr %s574, 8
        %s576 = scalar_lea.vmem %s5, %s575
        %s577 = smul.u32 2, %s21
        %s578 = ssub.s32 5, %s577
        %p579 = scmp.lt.s32.totalorder %s578, 2
        %s580 = scalar_select %p579, %s578, 2
        %s581 = smul.u32 128, %s580
        %s582 = smul.u32 2, %s21
        %s583 = ssub.s32 5, %s582
        %p584 = scmp.lt.s32.totalorder %s583, 2
        %s585 = scalar_select %p584, %s583, 2
        %s586 = smul.u32 128, %s585
        %p587 = scmp.lt.s32.totalorder %s582, 4
        %s588 = scalar_select %p587, %s582, 4
        %s589 = smul.addr %s588, 8
        %s590 = scalar_lea.vmem %s7, %s589
        %s591 = smul.u32 2, %s21
        %s592 = ssub.s32 5, %s591
        %p593 = scmp.lt.s32.totalorder %s592, 2
        %s594 = scalar_select %p593, %s592, 2
        %s595 = smul.u32 128, %s594
        %p596 = scmp.eq.s32.totalorder %s21, 0
        // Predicated region
        $region95: #{tpu_custom_call.1} parent=85 // pred_check
          %p597 = pneg %p596
        $region96: #{tpu_custom_call.1} parent=85 // pred_check_branch
          %599 = sbr.rel (%p597) target = $region98
        $region97: #{tpu_custom_call.1} parent=85 // pred_region
          %s600 = scalar_lea.smem [#allocation2], 0
          %601 = sst [smem:[%s600]] 0.0
          %s602 = scalar_lea.smem [#allocation2], 1
          %603 = sst [smem:[%s602]] 0.0
          %s604 = scalar_lea.smem [#allocation2], 2
          %605 = sst [smem:[%s604]] 0.0
          %s606 = scalar_lea.smem [#allocation2], 3
          %607 = sst [smem:[%s606]] 0.0
          %s608 = scalar_lea.smem [#allocation2], 4
          %609 = sst [smem:[%s608]] 0.0
          %s610 = scalar_lea.smem [#allocation2], 5
          %611 = sst [smem:[%s610]] 0.0
          %s612 = scalar_lea.smem [#allocation2], 6
          %613 = sst [smem:[%s612]] 0.0
          %s614 = scalar_lea.smem [#allocation2], 7
          %615 = sst [smem:[%s614]] 0.0
        $region98: #{tpu_custom_call.1} parent=85 // pred_fallthru
          _
        %v616 = vlaneseq
        %v617 = vshrl.u32 %v616, 7
        %v618 = vadd.s32 %v617, 8
        %s619 = smul.u32 %s21, 16
        %v620 = vstv %s619
        %v621 = vadd.s32 %v617, %v620
        %v622 = vadd.s32 %v618, %v620
        %vm623 = vcmp.lt.s32.totalorder %v621, 40
        %vm624 = vcmp.lt.s32.totalorder %v622, 40
        %v625 = vsel %vm623, 1, 0
        %v626 = vsel %vm624, 1, 0
        %v627 = vcvt.s32.f32 %v625
        %v628 = vcvt.s32.f32 %v626
        %v629 = vld [vmem:[%s520] sm:$0xff]
        %v630 = vld [vmem:[%s520 + $0x8] sm:$0xff]
        %v631 = vlaneseq
        %v632 = vand.u32 %v631, 127
        %633 = vset.pattern.permute.xlu0 0
        %634 = vperm.xlu0 %633, %v629
        %v635 = vpop.permute.xlu0 %634
        %636 = vset.pattern.permute.xlu0 0
        %637 = vperm.xlu0 %636, %v630
        %v638 = vpop.permute.xlu0 %637
        %vm639 = vcmp.eq.s32.totalorder %v632, %v635
        %vm640 = vcmp.eq.s32.totalorder %v632, %v638
        %v641 = vld [vmem:[%s534] sm:$0xff]
        %v642 = vld [vmem:[%s534 + $0x8] sm:$0xff]
        %vm643 = vcmp.eq.s32.totalorder %v625, 1
        %vm644 = vcmp.eq.s32.totalorder %v626, 1
        %v645 = vsel %vm643, %v641, 0.0
        %v646 = vsel %vm644, %v642, 0.0
        %vm647 = vcmask 130048
        %v648 = vsel %vm647, %v645, -inf
        %649 = vmax.xlane.f32.xlu0 %v648
        %v650 = vpop.xlane.xlu0 %649
        %v651 = vsel %vm647, %v646, -inf
        %652 = vmax.xlane.f32.xlu0 %v651
        %v653 = vpop.xlane.xlu0 %652
        %v654 = vsub.f32 %v645, %v650
        %v655 = vsub.f32 %v646, %v653
        %v656 = vmul.f32 %v654, 1.442695
        %v657 = vpow.pop %v656
        %v658 = vmul.f32 %v655, 1.442695
        %v659 = vpow.pop %v658
        %v660 = vsel %vm647, %v657, 0.0
        %661 = vadd.xlane.f32.xlu0 %v660
        %v662 = vpop.xlane.xlu0 %661
        %v663 = vsel %vm647, %v659, 0.0
        %664 = vadd.xlane.f32.xlu0 %v663
        %v665 = vpop.xlane.xlu0 %664
        %v666 = vlog2.pop %v662
        %v667 = vmul.f32 %v666, 0.6931472
        %v668 = vlog2.pop %v665
        %v669 = vmul.f32 %v668, 0.6931472
        %s670 = sld [smem:[#allocation2]]
        %v671 = vsel %vm639, %v654, 0.0
        %v672 = vsel %vm640, %v655, 0.0
        %v673 = vsel %vm647, %v671, 0.0
        %674 = vadd.xlane.f32.xlu0 %v673
        %v675 = vpop.xlane.xlu0 %674
        %v676 = vsel %vm647, %v672, 0.0
        %677 = vadd.xlane.f32.xlu0 %v676
        %v678 = vpop.xlane.xlu0 %677
        %v679 = vsub.f32 %v675, %v667
        %v680 = vsub.f32 %v678, %v669
        %v681 = vsel %vm647, %v654, 0.0
        %682 = vadd.xlane.f32.xlu0 %v681
        %v683 = vpop.xlane.xlu0 %682
        %v684 = vsel %vm647, %v655, 0.0
        %685 = vadd.xlane.f32.xlu0 %v684
        %v686 = vpop.xlane.xlu0 %685
        %v687 = vmul.f32 %v683, 0.0625
        %v688 = vmul.f32 %v686, 0.0625
        %v689 = vsub.f32 %v687, %v667
        %v690 = vsub.f32 %v688, %v669
        %v691 = vmul.f32 %v679, -0.9
        %v692 = vmul.f32 %v680, -0.9
        %v693 = vmul.f32 %v689, 0.1
        %v694 = vmul.f32 %v690, 0.1
        %v695 = vsub.f32 %v691, %v693
        %v696 = vsub.f32 %v692, %v694
        %v697 = vmul.f32 %v695, %v627
        %v698 = vmul.f32 %v696, %v628
        %vm699 = vcmask 7168
        %v700 = vsel %vm699, %v697, 0.0
        %v701 = vsel %vm699, %v698, 0.0
        %v702 = vadd.f32 %v700, %v701
        %703 = vadd.xlane.f32.xlu0 %v702
        %v704 = vpop.xlane.xlu0 %703
        %v705 = vrot.slane %v704, 4
        %v706 = vadd.f32 %v704, %v705
        %v707 = vrot.slane %v706, 2
        %v708 = vadd.f32 %v706, %v707
        %v709 = vrot.slane %v708, 1
        %v710 = vadd.f32 %v708, %v709
        %s711 = vtos %v710
        %s712 = sadd.f32 %s670, %s711
        %s713 = scalar_lea.smem [#allocation2], 0
        %714 = sst [smem:[%s713]] %s712
        %v715 = vld [vmem:[%s548] sm:$0xff]
        %v716 = vld [vmem:[%s548 + $0x8] sm:$0xff]
        %v717 = vsel %vm643, %v715, 0.0
        %v718 = vsel %vm644, %v716, 0.0
        %v719 = vsel %vm647, %v717, -inf
        %720 = vmax.xlane.f32.xlu0 %v719
        %v721 = vpop.xlane.xlu0 %720
        %v722 = vsel %vm647, %v718, -inf
        %723 = vmax.xlane.f32.xlu0 %v722
        %v724 = vpop.xlane.xlu0 %723
        %v725 = vsub.f32 %v717, %v721
        %v726 = vsub.f32 %v718, %v724
        %v727 = vmul.f32 %v725, 1.442695
        %v728 = vpow.pop %v727
        %v729 = vmul.f32 %v726, 1.442695
        %v730 = vpow.pop %v729
        %v731 = vsel %vm647, %v728, 0.0
        %732 = vadd.xlane.f32.xlu0 %v731
        %v733 = vpop.xlane.xlu0 %732
        %v734 = vsel %vm647, %v730, 0.0
        %735 = vadd.xlane.f32.xlu0 %v734
        %v736 = vpop.xlane.xlu0 %735
        %v737 = vlog2.pop %v733
        %v738 = vmul.f32 %v737, 0.6931472
        %v739 = vlog2.pop %v736
        %v740 = vmul.f32 %v739, 0.6931472
        %v741 = vsel %vm639, %v725, 0.0
        %v742 = vsel %vm640, %v726, 0.0
        %v743 = vsel %vm647, %v741, 0.0
        %744 = vadd.xlane.f32.xlu0 %v743
        %v745 = vpop.xlane.xlu0 %744
        %v746 = vsel %vm647, %v742, 0.0
        %747 = vadd.xlane.f32.xlu0 %v746
        %v748 = vpop.xlane.xlu0 %747
        %v749 = vsub.f32 %v745, %v738
        %v750 = vsub.f32 %v748, %v740
        %v751 = vsel %vm647, %v725, 0.0
        %752 = vadd.xlane.f32.xlu0 %v751
        %v753 = vpop.xlane.xlu0 %752
        %v754 = vsel %vm647, %v726, 0.0
        %755 = vadd.xlane.f32.xlu0 %v754
        %v756 = vpop.xlane.xlu0 %755
        %v757 = vmul.f32 %v753, 0.0625
        %v758 = vmul.f32 %v756, 0.0625
        %v759 = vsub.f32 %v757, %v738
        %v760 = vsub.f32 %v758, %v740
        %v761 = vmul.f32 %v749, -0.9
        %v762 = vmul.f32 %v750, -0.9
        %v763 = vmul.f32 %v759, 0.1
        %v764 = vmul.f32 %v760, 0.1
        %v765 = vsub.f32 %v761, %v763
        %v766 = vsub.f32 %v762, %v764
        %v767 = vmul.f32 %v765, %v627
        %v768 = vmul.f32 %v766, %v628
        %v769 = vsel %vm699, %v767, 0.0
        %v770 = vsel %vm699, %v768, 0.0
        %v771 = vadd.f32 %v769, %v770
        %772 = vadd.xlane.f32.xlu0 %v771
        %v773 = vpop.xlane.xlu0 %772
        %v774 = vrot.slane %v773, 4
        %v775 = vadd.f32 %v773, %v774
        %v776 = vrot.slane %v775, 2
        %v777 = vadd.f32 %v775, %v776
        %v778 = vrot.slane %v777, 1
        %v779 = vadd.f32 %v777, %v778
        %s780 = vtos %v779
        %v781 = vrcp.pop %v733
        %v782 = vmul.f32 1.0, %v781
        %v783 = vrcp.pop %v736
        %v784 = vmul.f32 1.0, %v783
        %v785 = vmul.f32 %v728, %v782
        %v786 = vmul.f32 %v730, %v784
        %v787 = vmul.f32 %v785, %v725
        %v788 = vmul.f32 %v786, %v726
        %v789 = vsel %vm647, %v787, 0.0
        %790 = vadd.xlane.f32.xlu0 %v789
        %v791 = vpop.xlane.xlu0 %790
        %v792 = vsel %vm647, %v788, 0.0
        %793 = vadd.xlane.f32.xlu0 %v792
        %v794 = vpop.xlane.xlu0 %793
        %v795 = vsub.f32 %v791, %v738
        %v796 = vsub.f32 %v794, %v740
        %v797 = vld [vmem:[%s562] sm:$0xff]
        %v798 = vld [vmem:[%s562 + $0x8] sm:$0xff]
        %v799 = vsel %vm643, %v797, 0.0
        %v800 = vsel %vm644, %v798, 0.0
        %v801 = vsel %vm647, %v799, -inf
        %802 = vmax.xlane.f32.xlu0 %v801
        %v803 = vpop.xlane.xlu0 %802
        %v804 = vsel %vm647, %v800, -inf
        %805 = vmax.xlane.f32.xlu0 %v804
        %v806 = vpop.xlane.xlu0 %805
        %v807 = vsub.f32 %v799, %v803
        %v808 = vsub.f32 %v800, %v806
        %v809 = vmul.f32 %v807, 1.442695
        %v810 = vpow.pop %v809
        %v811 = vmul.f32 %v808, 1.442695
        %v812 = vpow.pop %v811
        %v813 = vsel %vm647, %v810, 0.0
        %814 = vadd.xlane.f32.xlu0 %v813
        %v815 = vpop.xlane.xlu0 %814
        %v816 = vsel %vm647, %v812, 0.0
        %817 = vadd.xlane.f32.xlu0 %v816
        %v818 = vpop.xlane.xlu0 %817
        %v819 = vlog2.pop %v815
        %v820 = vmul.f32 %v819, 0.6931472
        %v821 = vlog2.pop %v818
        %v822 = vmul.f32 %v821, 0.6931472
        %v823 = vsel %vm639, %v807, 0.0
        %v824 = vsel %vm640, %v808, 0.0
        %v825 = vsel %vm647, %v823, 0.0
        %826 = vadd.xlane.f32.xlu0 %v825
        %v827 = vpop.xlane.xlu0 %826
        %v828 = vsel %vm647, %v824, 0.0
        %829 = vadd.xlane.f32.xlu0 %v828
        %v830 = vpop.xlane.xlu0 %829
        %v831 = vsub.f32 %v827, %v820
        %v832 = vsub.f32 %v830, %v822
        %v833 = vsel %vm647, %v807, 0.0
        %834 = vadd.xlane.f32.xlu0 %v833
        %v835 = vpop.xlane.xlu0 %834
        %v836 = vsel %vm647, %v808, 0.0
        %837 = vadd.xlane.f32.xlu0 %v836
        %v838 = vpop.xlane.xlu0 %837
        %v839 = vmul.f32 %v835, 0.0625
        %v840 = vmul.f32 %v838, 0.0625
        %v841 = vsub.f32 %v839, %v820
        %v842 = vsub.f32 %v840, %v822
        %v843 = vmul.f32 %v831, -0.9
        %v844 = vmul.f32 %v832, -0.9
        %v845 = vmul.f32 %v841, 0.1
        %v846 = vmul.f32 %v842, 0.1
        %v847 = vsub.f32 %v843, %v845
        %v848 = vsub.f32 %v844, %v846
        %v849 = vmul.f32 %v847, %v627
        %v850 = vmul.f32 %v848, %v628
        %v851 = vsel %vm699, %v849, 0.0
        %v852 = vsel %vm699, %v850, 0.0
        %v853 = vadd.f32 %v851, %v852
        %854 = vadd.xlane.f32.xlu0 %v853
        %v855 = vpop.xlane.xlu0 %854
        %v856 = vrot.slane %v855, 4
        %v857 = vadd.f32 %v855, %v856
        %v858 = vrot.slane %v857, 2
        %v859 = vadd.f32 %v857, %v858
        %v860 = vrot.slane %v859, 1
        %v861 = vadd.f32 %v859, %v860
        %s862 = vtos %v861
        %s863 = sadd.f32 %s780, %s862
        %v864 = vmul.f32 %v785, %v807
        %v865 = vmul.f32 %v786, %v808
        %v866 = vsel %vm647, %v864, 0.0
        %867 = vadd.xlane.f32.xlu0 %v866
        %v868 = vpop.xlane.xlu0 %867
        %v869 = vsel %vm647, %v865, 0.0
        %870 = vadd.xlane.f32.xlu0 %v869
        %v871 = vpop.xlane.xlu0 %870
        %v872 = vsub.f32 %v868, %v820
        %v873 = vsub.f32 %v871, %v822
        %v874 = vsub.f32 %v795, %v872
        %v875 = vsub.f32 %v796, %v873
        %v876 = vmul.f32 %v874, %v627
        %v877 = vmul.f32 %v875, %v628
        %v878 = vsel %vm699, %v876, 0.0
        %v879 = vsel %vm699, %v877, 0.0
        %v880 = vadd.f32 %v878, %v879
        %881 = vadd.xlane.f32.xlu0 %v880
        %v882 = vpop.xlane.xlu0 %881
        %v883 = vrot.slane %v882, 4
        %v884 = vadd.f32 %v882, %v883
        %v885 = vrot.slane %v884, 2
        %v886 = vadd.f32 %v884, %v885
        %v887 = vrot.slane %v886, 1
        %v888 = vadd.f32 %v886, %v887
        %s889 = vtos %v888
        %s890 = sadd.f32 %s889, 0.0
        %v891 = vld [vmem:[%s576] sm:$0xff]
        %v892 = vld [vmem:[%s576 + $0x8] sm:$0xff]
        %v893 = vsel %vm643, %v891, 0.0
        %v894 = vsel %vm644, %v892, 0.0
        %v895 = vsel %vm647, %v893, -inf
        %896 = vmax.xlane.f32.xlu0 %v895
        %v897 = vpop.xlane.xlu0 %896
        %v898 = vsel %vm647, %v894, -inf
        %899 = vmax.xlane.f32.xlu0 %v898
        %v900 = vpop.xlane.xlu0 %899
        %v901 = vsub.f32 %v893, %v897
        %v902 = vsub.f32 %v894, %v900
        %v903 = vmul.f32 %v901, 1.442695
        %v904 = vpow.pop %v903
        %v905 = vmul.f32 %v902, 1.442695
        %v906 = vpow.pop %v905
        %v907 = vsel %vm647, %v904, 0.0
        %908 = vadd.xlane.f32.xlu0 %v907
        %v909 = vpop.xlane.xlu0 %908
        %v910 = vsel %vm647, %v906, 0.0
        %911 = vadd.xlane.f32.xlu0 %v910
        %v912 = vpop.xlane.xlu0 %911
        %v913 = vlog2.pop %v909
        %v914 = vmul.f32 %v913, 0.6931472
        %v915 = vlog2.pop %v912
        %v916 = vmul.f32 %v915, 0.6931472
        %v917 = vsel %vm639, %v901, 0.0
        %v918 = vsel %vm640, %v902, 0.0
        %v919 = vsel %vm647, %v917, 0.0
        %920 = vadd.xlane.f32.xlu0 %v919
        %v921 = vpop.xlane.xlu0 %920
        %v922 = vsel %vm647, %v918, 0.0
        %923 = vadd.xlane.f32.xlu0 %v922
        %v924 = vpop.xlane.xlu0 %923
        %v925 = vsub.f32 %v921, %v914
        %v926 = vsub.f32 %v924, %v916
        %v927 = vsel %vm647, %v901, 0.0
        %928 = vadd.xlane.f32.xlu0 %v927
        %v929 = vpop.xlane.xlu0 %928
        %v930 = vsel %vm647, %v902, 0.0
        %931 = vadd.xlane.f32.xlu0 %v930
        %v932 = vpop.xlane.xlu0 %931
        %v933 = vmul.f32 %v929, 0.0625
        %v934 = vmul.f32 %v932, 0.0625
        %v935 = vsub.f32 %v933, %v914
        %v936 = vsub.f32 %v934, %v916
        %v937 = vmul.f32 %v925, -0.9
        %v938 = vmul.f32 %v926, -0.9
        %v939 = vmul.f32 %v935, 0.1
        %v940 = vmul.f32 %v936, 0.1
        %v941 = vsub.f32 %v937, %v939
        %v942 = vsub.f32 %v938, %v940
        %v943 = vmul.f32 %v941, %v627
        %v944 = vmul.f32 %v942, %v628
        %v945 = vsel %vm699, %v943, 0.0
        %v946 = vsel %vm699, %v944, 0.0
        %v947 = vadd.f32 %v945, %v946
        %948 = vadd.xlane.f32.xlu0 %v947
        %v949 = vpop.xlane.xlu0 %948
        %v950 = vrot.slane %v949, 4
        %v951 = vadd.f32 %v949, %v950
        %v952 = vrot.slane %v951, 2
        %v953 = vadd.f32 %v951, %v952
        %v954 = vrot.slane %v953, 1
        %v955 = vadd.f32 %v953, %v954
        %s956 = vtos %v955
        %s957 = sadd.f32 %s863, %s956
        %v958 = vmul.f32 %v785, %v901
        %v959 = vmul.f32 %v786, %v902
        %v960 = vsel %vm647, %v958, 0.0
        %961 = vadd.xlane.f32.xlu0 %v960
        %v962 = vpop.xlane.xlu0 %961
        %v963 = vsel %vm647, %v959, 0.0
        %964 = vadd.xlane.f32.xlu0 %v963
        %v965 = vpop.xlane.xlu0 %964
        %v966 = vsub.f32 %v962, %v914
        %v967 = vsub.f32 %v965, %v916
        %v968 = vsub.f32 %v795, %v966
        %v969 = vsub.f32 %v796, %v967
        %v970 = vmul.f32 %v968, %v627
        %v971 = vmul.f32 %v969, %v628
        %v972 = vsel %vm699, %v970, 0.0
        %v973 = vsel %vm699, %v971, 0.0
        %v974 = vadd.f32 %v972, %v973
        %975 = vadd.xlane.f32.xlu0 %v974
        %v976 = vpop.xlane.xlu0 %975
        %v977 = vrot.slane %v976, 4
        %v978 = vadd.f32 %v976, %v977
        %v979 = vrot.slane %v978, 2
        %v980 = vadd.f32 %v978, %v979
        %v981 = vrot.slane %v980, 1
        %v982 = vadd.f32 %v980, %v981
        %s983 = vtos %v982
        %s984 = sadd.f32 %s890, %s983
        %s985 = sld [smem:[#allocation2 + $0x1]]
        %s986 = sadd.f32 %s985, %s957
        %s987 = scalar_lea.smem [#allocation2], 1
        %988 = sst [smem:[%s987]] %s986
        %s989 = sld [smem:[#allocation2 + $0x3]]
        %s990 = sadd.f32 %s989, %s984
        %s991 = scalar_lea.smem [#allocation2], 3
        %992 = sst [smem:[%s991]] %s990
        %v993 = vld [vmem:[%s431] sm:$0xff]
        %v994 = vld [vmem:[%s431 + $0x8] sm:$0xff]
        %v995 = vsub.f32 %v993, %v994
        %s996 = smul.u32 %s21, 8
        %v997 = vstv %s996
        %v998 = vadd.s32 %v617, %v997
        %vm999 = vcmp.lt.s32.totalorder %v998, 20
        %v1000 = vsel %vm999, 1, 0
        %vm1001 = vcmp.eq.s32.totalorder %v1000, 1
        %v1002 = vsel %vm1001, %v995, 0.0
        %s1003 = sld [smem:[#allocation2 + $0x2]]
        %v1004 = vmul.f32 %v1002, %v1002
        %vm1005 = vcmask 261120
        %v1006 = vsel %vm1005, %v1004, 0.0
        %1007 = vadd.xlane.f32.xlu0 %v1006
        %v1008 = vpop.xlane.xlu0 %1007
        %v1009 = vrot.slane %v1008, 4
        %v1010 = vadd.f32 %v1008, %v1009
        %v1011 = vrot.slane %v1010, 2
        %v1012 = vadd.f32 %v1010, %v1011
        %v1013 = vrot.slane %v1012, 1
        %v1014 = vadd.f32 %v1012, %v1013
        %s1015 = vtos %v1014
        %s1016 = sadd.f32 %s1003, %s1015
        %s1017 = scalar_lea.smem [#allocation2], 2
        %1018 = sst [smem:[%s1017]] %s1016
        %v1019 = vld [vmem:[%s590] sm:$0xff]
        %v1020 = vld [vmem:[%s590 + $0x8] sm:$0xff]
        %v1021 = vsel %vm643, %v1019, 0.0
        %v1022 = vsel %vm644, %v1020, 0.0
        %s1023 = sld [smem:[#allocation2 + $0x4]]
        %v1024 = vadd.f32 %v1021, 1e-08
        %v1025 = vadd.f32 %v1022, 1e-08
        %v1026 = vlog2.pop %v1024
        %v1027 = vmul.f32 %v1026, 0.6931472
        %v1028 = vlog2.pop %v1025
        %v1029 = vmul.f32 %v1028, 0.6931472
        %v1030 = vmul.f32 %v1021, %v1027
        %v1031 = vmul.f32 %v1022, %v1029
        %v1032 = vsel %vm1005, %v1030, 0.0
        %v1033 = vsel %vm1005, %v1031, 0.0
        %v1034 = vadd.f32 %v1032, %v1033
        %1035 = vadd.xlane.f32.xlu0 %v1034
        %v1036 = vpop.xlane.xlu0 %1035
        %v1037 = vrot.slane %v1036, 4
        %v1038 = vadd.f32 %v1036, %v1037
        %v1039 = vrot.slane %v1038, 2
        %v1040 = vadd.f32 %v1038, %v1039
        %v1041 = vrot.slane %v1040, 1
        %v1042 = vadd.f32 %v1040, %v1041
        %s1043 = vtos %v1042
        %s1044 = sadd.f32 %s1023, %s1043
        %s1045 = scalar_lea.smem [#allocation2], 4
        %1046 = sst [smem:[%s1045]] %s1044
        %p1047 = scmp.eq.s32.totalorder %s21, 2
        // Predicated region
        $region99: #{tpu_custom_call.1} parent=85 // pred_check
          %p1048 = pneg %p1047
        $region100: #{tpu_custom_call.1} parent=85 // pred_check_branch
          %1050 = sbr.rel (%p1048) target = $region102
        $region101: #{tpu_custom_call.1} parent=85 // pred_region
          %s1051 = sld [smem:[#allocation2]]
          %s1052 = smul.f32 %s1051, 0.025
          %s1053 = sld [smem:[#allocation2 + $0x1]]
          %s1054 = smul.f32 %s1053, 0.008333334
          %s1055 = sld [smem:[#allocation3]]
          %s1056 = smul.f32 %s1055, %s1052
          %s1057 = sld [smem:[#allocation3 + $0x1]]
          %s1058 = smul.f32 %s1057, %s1054
          %s1059 = sadd.f32 %s1056, %s1058
          %s1060 = scalar_lea.smem [#allocation7], 0
          %1061 = sst [smem:[%s1060]] %s1052
          %s1062 = scalar_lea.smem [#allocation7], 1
          %1063 = sst [smem:[%s1062]] %s1054
          %s1064 = sld [smem:[#allocation2 + $0x2]]
          %s1065 = smul.f32 %s1064, 0.0015625
          %s1066 = scalar_lea.smem [#allocation7], 2
          %1067 = sst [smem:[%s1066]] %s1065
          %s1068 = sld [smem:[#allocation3 + $0x2]]
          %s1069 = smul.f32 %s1068, %s1065
          %s1070 = sadd.f32 %s1059, %s1069
          %s1071 = sld [smem:[#allocation2 + $0x3]]
          %s1072 = smul.f32 %s1071, 0.0125
          %s1073 = scalar_lea.smem [#allocation7], 3
          %1074 = sst [smem:[%s1073]] %s1072
          %s1075 = sld [smem:[#allocation3 + $0x3]]
          %s1076 = smul.f32 %s1075, %s1072
          %s1077 = sadd.f32 %s1070, %s1076
          %s1078 = sld [smem:[#allocation2 + $0x4]]
          %s1079 = smul.f32 %s1078, 0.00625
          %s1080 = scalar_lea.smem [#allocation7], 4
          %1081 = sst [smem:[%s1080]] %s1079
          %s1082 = sld [smem:[#allocation3 + $0x4]]
          %s1083 = smul.f32 %s1082, %s1079
          %s1084 = sadd.f32 %s1077, %s1083
          %s1085 = scalar_lea.smem [#allocation7], 5
          %1086 = sst [smem:[%s1085]] %s1084
        $region102: #{tpu_custom_call.1} parent=85 // pred_fallthru
          _
        // Predicated region
        $region103: #{tpu_custom_call.1} parent=85 // pred_check
          %p1087 = pneg %p237
        $region104: #{tpu_custom_call.1} parent=85 // pred_check_branch
          %1089 = sbr.rel (%p1087) target = $region106
        $region105: #{tpu_custom_call.1} parent=85 // pred_region
          %s1091 = ssub.s32 16, 16
          %1092 = vsyncadd [#allocation4], %s1091
          %1095 = dma.smem_to_hbm [#allocation7], 16, %s8, [#allocation4]
        $region106: #{tpu_custom_call.1} parent=85 // pred_fallthru
          _
        // Predicated region
        $region107: #{tpu_custom_call.1} parent=85 // pred_check
          %p1096 = pneg %p237
        $region108: #{tpu_custom_call.1} parent=85 // pred_check_branch
          %1098 = sbr.rel (%p1096) target = $region110
        $region109: #{tpu_custom_call.1} parent=85 // pred_region
          %1099 = dma.done [#allocation4], 16
        $region110: #{tpu_custom_call.1} parent=85 // pred_fallthru
          _
        %1100 = sfence
      $region86: #{tpu_custom_call.1} parent=5 // pred_fallthru
        _
      %p1101 = scmp.le.s32.totalorder 2, %s16
      // Predicated region
      $region111: #{tpu_custom_call.1} parent=5 // pred_check
        %p1102 = pneg %p1101
      $region112: #{tpu_custom_call.1} parent=5 // pred_check_branch
        %1104 = sbr.rel (%p1102) target = $region114
      $region113: #{tpu_custom_call.1} parent=5 // pred_region
        %s1105 = ssub.s32 %s16, 2
      $region114: #{tpu_custom_call.1} parent=5 // pred_fallthru
        _
    $region6: #{tpu_custom_call.1} parent=1 // loop_footer
      %s20 = sadd.s32 1, %s16
    $region7: #{tpu_custom_call.1} parent=1 // loop_footer_branch
      %15 = sbr.rel target = $region3
    $region8: #{tpu_custom_call.1} parent=1 // loop_exit
      _
    %1106 = vsyncpa [#allocation4], 1
    %s1107 = scalar_lea.sflag [#allocation4], 1
    %1108 = vsyncpa %s1107, 1
    %1109 = vsyncpa [#allocation5], 1
    %s1110 = scalar_lea.sflag [#allocation5], 1
    %1111 = vsyncpa %s1110, 1

</llo_original>
